<compile_context>
chip_gen: v7x
topology: tpu7x:2x2x1
jax: 0.10.0
libtpu: 0.0.40
codegen_flags: <defaults>
</compile_context>

<pallas_src>
import functools

import jax
import jax.numpy as jnp
from jax import lax
from jax.experimental import pallas as pl
from jax.experimental.pallas import tpu as pltpu


def _round_up(a, b):
    return (a + b - 1) // b * b


def _rel_loss_kernel(i_ids_ref, j_ids_ref,            # scalar-prefetch (SMEM)
                     xr_ref, xc_ref, tr_ref, tc_ref,  # feature tiles
                     rxn_ref, rtn_ref, cxn_ref, ctn_ref,  # hoisted row norms
                     out_ref,                          # (8, tile) partial sums
                     *, n, tile, strip, padded):
    g = pl.program_id(0)
    i = i_ids_ref[g]          # row-tile index of this upper-triangular pair
    j = j_ids_ref[g]          # col-tile index

    # Off-diagonal tiles stand in for their mirror-image lower tile too.
    weight = jnp.where(i == j, jnp.float32(1.0), jnp.float32(2.0))

    # Column-side norms, lane-dense (1, tile); tiny, load once per step.
    cx = cxn_ref[...]
    ct = ctn_ref[...]

    if padded:
        col_valid = (j * tile + lax.broadcasted_iota(jnp.int32, (1, tile), 1)) < n

    contract = (((1,), (1,)), ((), ()))   # contract feature axis of both sides

    acc = jnp.zeros((8, tile), jnp.float32)

    # Strip-mine the (tile x tile) block into (strip x tile) row-strips so the
    # f32 intermediates stay well under the 64-vreg register file (no spills).
    for s in range(tile // strip):
        r0 = s * strip

        # Per-chunk loads inside the loop keep vreg live ranges short.
        xr = xr_ref[r0:r0 + strip, :]             # (strip, dx), native dtype
        tr = tr_ref[r0:r0 + strip, :]             # (strip, dt)
        xc = xc_ref[...]                          # (tile, dx)
        tc = tc_ref[...]                          # (tile, dt)
        rx = rxn_ref[r0:r0 + strip, :]            # (strip, 1) f32
        rt = rtn_ref[r0:r0 + strip, :]            # (strip, 1) f32

        gram_x = lax.dot_general(xr, xc, contract,
                                 preferred_element_type=jnp.float32)
        gram_t = lax.dot_general(tr, tc, contract,
                                 preferred_element_type=jnp.float32)

        d2x = jnp.maximum(rx + cx - 2.0 * gram_x, jnp.float32(1e-12))
        d2t = jnp.maximum(rt + ct - 2.0 * gram_t, jnp.float32(1e-12))

        # (sqrt(a) - sqrt(b))^2 == a + b - 2*sqrt(a*b): one sqrt instead of two.
        sq = d2x + d2t - 2.0 * jnp.sqrt(d2x * d2t)

        if padded:
            row_valid = (i * tile + r0
                         + lax.broadcasted_iota(jnp.int32, (strip, 1), 0)) < n
            sq = jnp.where(row_valid & col_valid, sq, jnp.float32(0.0))

        # Sublane-group reduction (strip, tile) -> (8, tile): aligned 8-row
        # slab adds on the VPU, keeps the output store lane-dense.
        partial = sq[0:8, :]
        for k in range(1, strip // 8):
            partial = partial + sq[k * 8:(k + 1) * 8, :]
        acc = acc + partial

    out_ref[...] = weight * acc


def rel_loss(x, target):
    """x: (n, dx), target: (n, dt). Returns scalar f32 loss."""
    n, dx = x.shape
    nt, dt = target.shape
    assert n == nt, "x and target must have the same number of rows"

    # 256-row DMA blocks (working set is tiny); shrink to 128 for small n so
    # padding waste stays bounded. 64-row strips inside the kernel.
    tile = min(256, _round_up(n, 128))
    n_pad = _round_up(n, tile)
    num_tiles = n_pad // tile
    strip = min(64, tile)
    padded = (n_pad != n)

    if padded:
        x = jnp.pad(x, ((0, n_pad - n), (0, 0)))
        target = jnp.pad(target, ((0, n_pad - n), (0, 0)))

    # Hoisted squared row norms (f32). Padded rows are zero -> zero norms.
    x32 = x.astype(jnp.float32)
    t32 = target.astype(jnp.float32)
    xnorm_r = jnp.sum(x32 * x32, axis=1, keepdims=True)   # (n_pad, 1)
    tnorm_r = jnp.sum(t32 * t32, axis=1, keepdims=True)   # (n_pad, 1)
    xnorm_c = xnorm_r.T                                    # (1, n_pad) lane-dense
    tnorm_c = tnorm_r.T

    # Upper-triangular tile-pair enumeration (static), ordered by row tile.
    pairs = [(i, j) for i in range(num_tiles) for j in range(i, num_tiles)]
    num_pairs = len(pairs)
    i_ids = jnp.asarray([p[0] for p in pairs], dtype=jnp.int32)
    j_ids = jnp.asarray([p[1] for p in pairs], dtype=jnp.int32)

    kernel = functools.partial(_rel_loss_kernel, n=n, tile=tile, strip=strip,
                               padded=padded)

    partials = pl.pallas_call(
        kernel,
        out_shape=jax.ShapeDtypeStruct((num_pairs, 8, tile), jnp.float32),
        grid_spec=pltpu.PrefetchScalarGridSpec(
            num_scalar_prefetch=2,
            grid=(num_pairs,),
            in_specs=[
                pl.BlockSpec((tile, dx), lambda g, ii, jj: (ii[g], 0)),  # x rows
                pl.BlockSpec((tile, dx), lambda g, ii, jj: (jj[g], 0)),  # x cols
                pl.BlockSpec((tile, dt), lambda g, ii, jj: (ii[g], 0)),  # t rows
                pl.BlockSpec((tile, dt), lambda g, ii, jj: (jj[g], 0)),  # t cols
                pl.BlockSpec((tile, 1), lambda g, ii, jj: (ii[g], 0)),   # ||x||^2 row
                pl.BlockSpec((tile, 1), lambda g, ii, jj: (ii[g], 0)),   # ||t||^2 row
                pl.BlockSpec((1, tile), lambda g, ii, jj: (0, jj[g])),   # ||x||^2 col
                pl.BlockSpec((1, tile), lambda g, ii, jj: (0, jj[g])),   # ||t||^2 col
            ],
            out_specs=pl.BlockSpec((None, 8, tile), lambda g, ii, jj: (g, 0, 0)),
        ),
        compiler_params=pltpu.CompilerParams(
            dimension_semantics=("parallel",)),
    )(i_ids, j_ids, x, x, target, target, xnorm_r, tnorm_r, xnorm_c, tnorm_c)

    # Finalize: Frobenius norm of (dist - dist_t).
    return jnp.sqrt(jnp.sum(partials))


def _rel_loss_ref(x, target):
    # Pure-JAX reference (HIGHEST matmul precision, matches the in-kernel
    # f32 MXU accumulation).
    x = x.astype(jnp.float32)
    t = target.astype(jnp.float32)
    hp = jax.lax.Precision.HIGHEST
    xx = jnp.sum(x * x, axis=1, keepdims=True)
    dx = jnp.sqrt(jnp.maximum(xx + xx.T - 2.0 * jnp.dot(x, x.T, precision=hp), 1e-12))
    tt = jnp.sum(t * t, axis=1, keepdims=True)
    dt_ = jnp.sqrt(jnp.maximum(tt + tt.T - 2.0 * jnp.dot(t, t.T, precision=hp), 1e-12))
    d = dx - dt_
    return jnp.sqrt(jnp.sum(d * d))


if __name__ == "__main__":
    key = jax.random.PRNGKey(0)
    k1, k2, k3, k4 = jax.random.split(key, 4)
    loss_fn = jax.jit(rel_loss)

    # Small shapes consistent with the module (n feature vectors per input).
    n, d_x, d_t = 8, 32, 16
    x = jax.random.normal(k1, (n, d_x), dtype=jnp.float32)
    target = jax.random.normal(k2, (n, d_t), dtype=jnp.float32)

    loss = loss_fn(x, target)
    jax.block_until_ready(loss)
    ref = _rel_loss_ref(x, target)
    assert jnp.allclose(loss, ref, rtol=1e-4, atol=1e-5), (loss, ref)

    # Larger, non-tile-aligned case: exercises the triangular multi-tile grid,
    # the off-diagonal 2x weighting, strip-mining and the padding mask.
    n2, d2x, d2t = 300, 48, 24
    x2 = jax.random.normal(k3, (n2, d2x), dtype=jnp.float32)
    t2 = jax.random.normal(k4, (n2, d2t), dtype=jnp.float32)
    loss2 = loss_fn(x2, t2)
    jax.block_until_ready(loss2)
    ref2 = _rel_loss_ref(x2, t2)
    assert jnp.allclose(loss2, ref2, rtol=1e-3, atol=1e-3), (loss2, ref2)

    print("KERNEL_OK")
</pallas_src>

<mosaic_0001>
module attributes {stable_mosaic.version = 11 : i64} {
  func.func @_rel_loss_kernel(%arg0: i32, %arg1: memref<1xi32, #tpu.memory_space<smem>>, %arg2: memref<1xi32, #tpu.memory_space<smem>>, %arg3: memref<128x32xf32, #tpu.memory_space<vmem>>, %arg4: memref<128x32xf32, #tpu.memory_space<vmem>>, %arg5: memref<128x16xf32, #tpu.memory_space<vmem>>, %arg6: memref<128x16xf32, #tpu.memory_space<vmem>>, %arg7: memref<128x1xf32, #tpu.memory_space<vmem>>, %arg8: memref<128x1xf32, #tpu.memory_space<vmem>>, %arg9: memref<1x128xf32, #tpu.memory_space<vmem>>, %arg10: memref<1x128xf32, #tpu.memory_space<vmem>>, %arg11: memref<1x8x128xf32, #tpu.memory_space<vmem>>) attributes {dimension_semantics = [#tpu.dimension_semantics<parallel>], iteration_bounds = array<i64: 1>, scalar_prefetch = 2 : i64, scratch_operands = 0 : i64, tpu.core_type = #tpu.core_type<tc>, window_params = [{transform_indices = @transform_0, window_bounds = array<i64: 128, 32>}, {transform_indices = @transform_1, window_bounds = array<i64: 128, 32>}, {transform_indices = @transform_2, window_bounds = array<i64: 128, 16>}, {transform_indices = @transform_3, window_bounds = array<i64: 128, 16>}, {transform_indices = @transform_4, window_bounds = array<i64: 128, 1>}, {transform_indices = @transform_5, window_bounds = array<i64: 128, 1>}, {transform_indices = @transform_6, window_bounds = array<i64: 1, 128>}, {transform_indices = @transform_7, window_bounds = array<i64: 1, 128>}, {transform_indices = @transform_8, window_bounds = array<i64: 1, 8, 128>}]} {
    %0 = arith.index_cast %arg0 : i32 to index
    %1 = memref.load %arg1[%0] : memref<1xi32, #tpu.memory_space<smem>>
    %2 = arith.index_cast %arg0 : i32 to index
    %3 = memref.load %arg2[%2] : memref<1xi32, #tpu.memory_space<smem>>
    %4 = arith.cmpi eq, %1, %3 : i32
    %cst = arith.constant 1.000000e+00 : f32
    %cst_0 = arith.constant 2.000000e+00 : f32
    %5 = arith.select %4, %cst, %cst_0 : f32
    %c0 = arith.constant 0 : index
    %c0_1 = arith.constant 0 : index
    %6 = vector.load %arg9[%c0, %c0_1] : memref<1x128xf32, #tpu.memory_space<vmem>>, vector<1x128xf32>
    %c0_2 = arith.constant 0 : index
    %c0_3 = arith.constant 0 : index
    %7 = vector.load %arg10[%c0_2, %c0_3] : memref<1x128xf32, #tpu.memory_space<vmem>>, vector<1x128xf32>
    %c128_i32 = arith.constant 128 : i32
    %8 = arith.muli %3, %c128_i32 : i32
    %9 = tpu.iota {dimensions = array<i32: 1>} : vector<1x128xi32>
    %10 = vector.broadcast %8 : i32 to vector<1x128xi32>
    %11 = arith.addi %10, %9 : vector<1x128xi32>
    %c8_i32 = arith.constant 8 : i32
    %12 = vector.broadcast %c8_i32 : i32 to vector<1x128xi32>
    %13 = arith.cmpi slt, %11, %12 : vector<1x128xi32>
    %cst_4 = arith.constant 0.000000e+00 : f32
    %14 = vector.broadcast %cst_4 : f32 to vector<8x128xf32>
    %c0_5 = arith.constant 0 : index
    %c0_6 = arith.constant 0 : index
    %15 = vector.load %arg3[%c0_5, %c0_6] : memref<128x32xf32, #tpu.memory_space<vmem>>, vector<64x32xf32>
    %c0_7 = arith.constant 0 : index
    %c0_8 = arith.constant 0 : index
    %16 = vector.load %arg5[%c0_7, %c0_8] : memref<128x16xf32, #tpu.memory_space<vmem>>, vector<64x16xf32>
    %c0_9 = arith.constant 0 : index
    %c0_10 = arith.constant 0 : index
    %17 = vector.load %arg4[%c0_9, %c0_10] : memref<128x32xf32, #tpu.memory_space<vmem>>, vector<128x32xf32>
    %c0_11 = arith.constant 0 : index
    %c0_12 = arith.constant 0 : index
    %18 = vector.load %arg6[%c0_11, %c0_12] : memref<128x16xf32, #tpu.memory_space<vmem>>, vector<128x16xf32>
    %c0_13 = arith.constant 0 : index
    %c0_14 = arith.constant 0 : index
    %19 = vector.load %arg7[%c0_13, %c0_14] : memref<128x1xf32, #tpu.memory_space<vmem>>, vector<64x1xf32>
    %c0_15 = arith.constant 0 : index
    %c0_16 = arith.constant 0 : index
    %20 = vector.load %arg8[%c0_15, %c0_16] : memref<128x1xf32, #tpu.memory_space<vmem>>, vector<64x1xf32>
    %cst_17 = arith.constant dense<0.000000e+00> : vector<64x128xf32>
    %21 = tpu.matmul %15, %17, %cst_17 {dimension_numbers = #tpu.dot_dimension_numbers<[1], [1], [0], [0], [0, 0, 1, 0], [], []>} : vector<64x32xf32>, vector<128x32xf32>, vector<64x128xf32> -> vector<64x128xf32>
    %cst_18 = arith.constant dense<0.000000e+00> : vector<64x128xf32>
    %22 = tpu.matmul %16, %18, %cst_18 {dimension_numbers = #tpu.dot_dimension_numbers<[1], [1], [0], [0], [0, 0, 1, 0], [], []>} : vector<64x16xf32>, vector<128x16xf32>, vector<64x128xf32> -> vector<64x128xf32>
    %23 = vector.broadcast %19 : vector<64x1xf32> to vector<64x128xf32>
    %24 = vector.broadcast %6 : vector<1x128xf32> to vector<64x128xf32>
    %25 = arith.addf %23, %24 : vector<64x128xf32>
    %cst_19 = arith.constant 2.000000e+00 : f32
    %26 = vector.broadcast %cst_19 : f32 to vector<64x128xf32>
    %27 = arith.mulf %26, %21 : vector<64x128xf32>
    %28 = arith.subf %25, %27 : vector<64x128xf32>
    %cst_20 = arith.constant 9.99999996E-13 : f32
    %29 = vector.broadcast %cst_20 : f32 to vector<64x128xf32>
    %30 = arith.maximumf %28, %29 : vector<64x128xf32>
    %31 = vector.broadcast %20 : vector<64x1xf32> to vector<64x128xf32>
    %32 = vector.broadcast %7 : vector<1x128xf32> to vector<64x128xf32>
    %33 = arith.addf %31, %32 : vector<64x128xf32>
    %cst_21 = arith.constant 2.000000e+00 : f32
    %34 = vector.broadcast %cst_21 : f32 to vector<64x128xf32>
    %35 = arith.mulf %34, %22 : vector<64x128xf32>
    %36 = arith.subf %33, %35 : vector<64x128xf32>
    %cst_22 = arith.constant 9.99999996E-13 : f32
    %37 = vector.broadcast %cst_22 : f32 to vector<64x128xf32>
    %38 = arith.maximumf %36, %37 : vector<64x128xf32>
    %39 = arith.addf %30, %38 : vector<64x128xf32>
    %40 = arith.mulf %30, %38 : vector<64x128xf32>
    %41 = math.sqrt %40 : vector<64x128xf32>
    %cst_23 = arith.constant 2.000000e+00 : f32
    %42 = vector.broadcast %cst_23 : f32 to vector<64x128xf32>
    %43 = arith.mulf %42, %41 : vector<64x128xf32>
    %44 = arith.subf %39, %43 : vector<64x128xf32>
    %c128_i32_24 = arith.constant 128 : i32
    %45 = arith.muli %1, %c128_i32_24 : i32
    %c0_i32 = arith.constant 0 : i32
    %46 = arith.addi %45, %c0_i32 : i32
    %47 = tpu.iota {dimensions = array<i32: 0>} : vector<64x1xi32>
    %48 = vector.broadcast %46 : i32 to vector<64x1xi32>
    %49 = arith.addi %48, %47 : vector<64x1xi32>
    %c8_i32_25 = arith.constant 8 : i32
    %50 = vector.broadcast %c8_i32_25 : i32 to vector<64x1xi32>
    %51 = arith.cmpi slt, %49, %50 : vector<64x1xi32>
    %52 = vector.broadcast %51 : vector<64x1xi1> to vector<64x128xi1>
    %53 = vector.broadcast %13 : vector<1x128xi1> to vector<64x128xi1>
    %54 = arith.andi %52, %53 : vector<64x128xi1>
    %cst_26 = arith.constant 0.000000e+00 : f32
    %55 = vector.broadcast %cst_26 : f32 to vector<64x128xf32>
    %56 = arith.select %54, %44, %55 : vector<64x128xi1>, vector<64x128xf32>
    %57 = vector.extract_strided_slice %56 {offsets = [0, 0], sizes = [8, 128], strides = [1, 1]} : vector<64x128xf32> to vector<8x128xf32>
    %58 = vector.extract_strided_slice %56 {offsets = [8, 0], sizes = [8, 128], strides = [1, 1]} : vector<64x128xf32> to vector<8x128xf32>
    %59 = arith.addf %57, %58 : vector<8x128xf32>
    %60 = vector.extract_strided_slice %56 {offsets = [16, 0], sizes = [8, 128], strides = [1, 1]} : vector<64x128xf32> to vector<8x128xf32>
    %61 = arith.addf %59, %60 : vector<8x128xf32>
    %62 = vector.extract_strided_slice %56 {offsets = [24, 0], sizes = [8, 128], strides = [1, 1]} : vector<64x128xf32> to vector<8x128xf32>
    %63 = arith.addf %61, %62 : vector<8x128xf32>
    %64 = vector.extract_strided_slice %56 {offsets = [32, 0], sizes = [8, 128], strides = [1, 1]} : vector<64x128xf32> to vector<8x128xf32>
    %65 = arith.addf %63, %64 : vector<8x128xf32>
    %66 = vector.extract_strided_slice %56 {offsets = [40, 0], sizes = [8, 128], strides = [1, 1]} : vector<64x128xf32> to vector<8x128xf32>
    %67 = arith.addf %65, %66 : vector<8x128xf32>
    %68 = vector.extract_strided_slice %56 {offsets = [48, 0], sizes = [8, 128], strides = [1, 1]} : vector<64x128xf32> to vector<8x128xf32>
    %69 = arith.addf %67, %68 : vector<8x128xf32>
    %70 = vector.extract_strided_slice %56 {offsets = [56, 0], sizes = [8, 128], strides = [1, 1]} : vector<64x128xf32> to vector<8x128xf32>
    %71 = arith.addf %69, %70 : vector<8x128xf32>
    %72 = arith.addf %14, %71 : vector<8x128xf32>
    %c64 = arith.constant 64 : index
    %c0_27 = arith.constant 0 : index
    %73 = vector.load %arg3[%c64, %c0_27] : memref<128x32xf32, #tpu.memory_space<vmem>>, vector<64x32xf32>
    %c64_28 = arith.constant 64 : index
    %c0_29 = arith.constant 0 : index
    %74 = vector.load %arg5[%c64_28, %c0_29] : memref<128x16xf32, #tpu.memory_space<vmem>>, vector<64x16xf32>
    %c0_30 = arith.constant 0 : index
    %c0_31 = arith.constant 0 : index
    %75 = vector.load %arg4[%c0_30, %c0_31] : memref<128x32xf32, #tpu.memory_space<vmem>>, vector<128x32xf32>
    %c0_32 = arith.constant 0 : index
    %c0_33 = arith.constant 0 : index
    %76 = vector.load %arg6[%c0_32, %c0_33] : memref<128x16xf32, #tpu.memory_space<vmem>>, vector<128x16xf32>
    %c64_34 = arith.constant 64 : index
    %c0_35 = arith.constant 0 : index
    %77 = vector.load %arg7[%c64_34, %c0_35] : memref<128x1xf32, #tpu.memory_space<vmem>>, vector<64x1xf32>
    %c64_36 = arith.constant 64 : index
    %c0_37 = arith.constant 0 : index
    %78 = vector.load %arg8[%c64_36, %c0_37] : memref<128x1xf32, #tpu.memory_space<vmem>>, vector<64x1xf32>
    %cst_38 = arith.constant dense<0.000000e+00> : vector<64x128xf32>
    %79 = tpu.matmul %73, %75, %cst_38 {dimension_numbers = #tpu.dot_dimension_numbers<[1], [1], [0], [0], [0, 0, 1, 0], [], []>} : vector<64x32xf32>, vector<128x32xf32>, vector<64x128xf32> -> vector<64x128xf32>
    %cst_39 = arith.constant dense<0.000000e+00> : vector<64x128xf32>
    %80 = tpu.matmul %74, %76, %cst_39 {dimension_numbers = #tpu.dot_dimension_numbers<[1], [1], [0], [0], [0, 0, 1, 0], [], []>} : vector<64x16xf32>, vector<128x16xf32>, vector<64x128xf32> -> vector<64x128xf32>
    %81 = vector.broadcast %77 : vector<64x1xf32> to vector<64x128xf32>
    %82 = vector.broadcast %6 : vector<1x128xf32> to vector<64x128xf32>
    %83 = arith.addf %81, %82 : vector<64x128xf32>
    %cst_40 = arith.constant 2.000000e+00 : f32
    %84 = vector.broadcast %cst_40 : f32 to vector<64x128xf32>
    %85 = arith.mulf %84, %79 : vector<64x128xf32>
    %86 = arith.subf %83, %85 : vector<64x128xf32>
    %cst_41 = arith.constant 9.99999996E-13 : f32
    %87 = vector.broadcast %cst_41 : f32 to vector<64x128xf32>
    %88 = arith.maximumf %86, %87 : vector<64x128xf32>
    %89 = vector.broadcast %78 : vector<64x1xf32> to vector<64x128xf32>
    %90 = vector.broadcast %7 : vector<1x128xf32> to vector<64x128xf32>
    %91 = arith.addf %89, %90 : vector<64x128xf32>
    %cst_42 = arith.constant 2.000000e+00 : f32
    %92 = vector.broadcast %cst_42 : f32 to vector<64x128xf32>
    %93 = arith.mulf %92, %80 : vector<64x128xf32>
    %94 = arith.subf %91, %93 : vector<64x128xf32>
    %cst_43 = arith.constant 9.99999996E-13 : f32
    %95 = vector.broadcast %cst_43 : f32 to vector<64x128xf32>
    %96 = arith.maximumf %94, %95 : vector<64x128xf32>
    %97 = arith.addf %88, %96 : vector<64x128xf32>
    %98 = arith.mulf %88, %96 : vector<64x128xf32>
    %99 = math.sqrt %98 : vector<64x128xf32>
    %cst_44 = arith.constant 2.000000e+00 : f32
    %100 = vector.broadcast %cst_44 : f32 to vector<64x128xf32>
    %101 = arith.mulf %100, %99 : vector<64x128xf32>
    %102 = arith.subf %97, %101 : vector<64x128xf32>
    %c128_i32_45 = arith.constant 128 : i32
    %103 = arith.muli %1, %c128_i32_45 : i32
    %c64_i32 = arith.constant 64 : i32
    %104 = arith.addi %103, %c64_i32 : i32
    %105 = tpu.iota {dimensions = array<i32: 0>} : vector<64x1xi32>
    %106 = vector.broadcast %104 : i32 to vector<64x1xi32>
    %107 = arith.addi %106, %105 : vector<64x1xi32>
    %c8_i32_46 = arith.constant 8 : i32
    %108 = vector.broadcast %c8_i32_46 : i32 to vector<64x1xi32>
    %109 = arith.cmpi slt, %107, %108 : vector<64x1xi32>
    %110 = vector.broadcast %109 : vector<64x1xi1> to vector<64x128xi1>
    %111 = vector.broadcast %13 : vector<1x128xi1> to vector<64x128xi1>
    %112 = arith.andi %110, %111 : vector<64x128xi1>
    %cst_47 = arith.constant 0.000000e+00 : f32
    %113 = vector.broadcast %cst_47 : f32 to vector<64x128xf32>
    %114 = arith.select %112, %102, %113 : vector<64x128xi1>, vector<64x128xf32>
    %115 = vector.extract_strided_slice %114 {offsets = [0, 0], sizes = [8, 128], strides = [1, 1]} : vector<64x128xf32> to vector<8x128xf32>
    %116 = vector.extract_strided_slice %114 {offsets = [8, 0], sizes = [8, 128], strides = [1, 1]} : vector<64x128xf32> to vector<8x128xf32>
    %117 = arith.addf %115, %116 : vector<8x128xf32>
    %118 = vector.extract_strided_slice %114 {offsets = [16, 0], sizes = [8, 128], strides = [1, 1]} : vector<64x128xf32> to vector<8x128xf32>
    %119 = arith.addf %117, %118 : vector<8x128xf32>
    %120 = vector.extract_strided_slice %114 {offsets = [24, 0], sizes = [8, 128], strides = [1, 1]} : vector<64x128xf32> to vector<8x128xf32>
    %121 = arith.addf %119, %120 : vector<8x128xf32>
    %122 = vector.extract_strided_slice %114 {offsets = [32, 0], sizes = [8, 128], strides = [1, 1]} : vector<64x128xf32> to vector<8x128xf32>
    %123 = arith.addf %121, %122 : vector<8x128xf32>
    %124 = vector.extract_strided_slice %114 {offsets = [40, 0], sizes = [8, 128], strides = [1, 1]} : vector<64x128xf32> to vector<8x128xf32>
    %125 = arith.addf %123, %124 : vector<8x128xf32>
    %126 = vector.extract_strided_slice %114 {offsets = [48, 0], sizes = [8, 128], strides = [1, 1]} : vector<64x128xf32> to vector<8x128xf32>
    %127 = arith.addf %125, %126 : vector<8x128xf32>
    %128 = vector.extract_strided_slice %114 {offsets = [56, 0], sizes = [8, 128], strides = [1, 1]} : vector<64x128xf32> to vector<8x128xf32>
    %129 = arith.addf %127, %128 : vector<8x128xf32>
    %130 = arith.addf %72, %129 : vector<8x128xf32>
    %131 = vector.broadcast %5 : f32 to vector<8x128xf32>
    %132 = arith.mulf %131, %130 : vector<8x128xf32>
    %c0_48 = arith.constant 0 : index
    %c0_49 = arith.constant 0 : index
    %c0_50 = arith.constant 0 : index
    %133 = vector.load %arg11[%c0_48, %c0_49, %c0_50] : memref<1x8x128xf32, #tpu.memory_space<vmem>>, vector<1x8x128xf32>
    %134 = vector.shape_cast %133 : vector<1x8x128xf32> to vector<8x128xf32>
    %135 = vector.shape_cast %132 : vector<8x128xf32> to vector<1x8x128xf32>
    tpu.vector_store %arg11[%c0_48, %c0_49, %c0_50], %135 {strides = array<i32>} : memref<1x8x128xf32, #tpu.memory_space<vmem>>, vector<1x8x128xf32>,
    return
  }
  func.func @transform_0(%arg0: i32, %arg1: memref<1xi32, #tpu.memory_space<smem>>, %arg2: memref<1xi32, #tpu.memory_space<smem>>) -> (i32, i32) {
    %0 = arith.index_cast %arg0 : i32 to index
    %1 = memref.load %arg1[%0] : memref<1xi32, #tpu.memory_space<smem>>
    %c0_i32 = arith.constant 0 : i32
    %c0_i32_0 = arith.constant 0 : i32
    return %1, %c0_i32 : i32, i32
  }
  func.func @transform_1(%arg0: i32, %arg1: memref<1xi32, #tpu.memory_space<smem>>, %arg2: memref<1xi32, #tpu.memory_space<smem>>) -> (i32, i32) {
    %0 = arith.index_cast %arg0 : i32 to index
    %1 = memref.load %arg2[%0] : memref<1xi32, #tpu.memory_space<smem>>
    %c0_i32 = arith.constant 0 : i32
    %c0_i32_0 = arith.constant 0 : i32
    return %1, %c0_i32 : i32, i32
  }
  func.func @transform_2(%arg0: i32, %arg1: memref<1xi32, #tpu.memory_space<smem>>, %arg2: memref<1xi32, #tpu.memory_space<smem>>) -> (i32, i32) {
    %0 = arith.index_cast %arg0 : i32 to index
    %1 = memref.load %arg1[%0] : memref<1xi32, #tpu.memory_space<smem>>
    %c0_i32 = arith.constant 0 : i32
    %c0_i32_0 = arith.constant 0 : i32
    return %1, %c0_i32 : i32, i32
  }
  func.func @transform_3(%arg0: i32, %arg1: memref<1xi32, #tpu.memory_space<smem>>, %arg2: memref<1xi32, #tpu.memory_space<smem>>) -> (i32, i32) {
    %0 = arith.index_cast %arg0 : i32 to index
    %1 = memref.load %arg2[%0] : memref<1xi32, #tpu.memory_space<smem>>
    %c0_i32 = arith.constant 0 : i32
    %c0_i32_0 = arith.constant 0 : i32
    return %1, %c0_i32 : i32, i32
  }
  func.func @transform_4(%arg0: i32, %arg1: memref<1xi32, #tpu.memory_space<smem>>, %arg2: memref<1xi32, #tpu.memory_space<smem>>) -> (i32, i32) {
    %0 = arith.index_cast %arg0 : i32 to index
    %1 = memref.load %arg1[%0] : memref<1xi32, #tpu.memory_space<smem>>
    %c0_i32 = arith.constant 0 : i32
    %c0_i32_0 = arith.constant 0 : i32
    return %1, %c0_i32 : i32, i32
  }
  func.func @transform_5(%arg0: i32, %arg1: memref<1xi32, #tpu.memory_space<smem>>, %arg2: memref<1xi32, #tpu.memory_space<smem>>) -> (i32, i32) {
    %0 = arith.index_cast %arg0 : i32 to index
    %1 = memref.load %arg1[%0] : memref<1xi32, #tpu.memory_space<smem>>
    %c0_i32 = arith.constant 0 : i32
    %c0_i32_0 = arith.constant 0 : i32
    return %1, %c0_i32 : i32, i32
  }
  func.func @transform_6(%arg0: i32, %arg1: memref<1xi32, #tpu.memory_space<smem>>, %arg2: memref<1xi32, #tpu.memory_space<smem>>) -> (i32, i32) {
    %0 = arith.index_cast %arg0 : i32 to index
    %1 = memref.load %arg2[%0] : memref<1xi32, #tpu.memory_space<smem>>
    %c0_i32 = arith.constant 0 : i32
    %c0_i32_0 = arith.constant 0 : i32
    return %c0_i32, %1 : i32, i32
  }
  func.func @transform_7(%arg0: i32, %arg1: memref<1xi32, #tpu.memory_space<smem>>, %arg2: memref<1xi32, #tpu.memory_space<smem>>) -> (i32, i32) {
    %0 = arith.index_cast %arg0 : i32 to index
    %1 = memref.load %arg2[%0] : memref<1xi32, #tpu.memory_space<smem>>
    %c0_i32 = arith.constant 0 : i32
    %c0_i32_0 = arith.constant 0 : i32
    return %c0_i32, %1 : i32, i32
  }
  func.func @transform_8(%arg0: i32, %arg1: memref<1xi32, #tpu.memory_space<smem>>, %arg2: memref<1xi32, #tpu.memory_space<smem>>) -> (i32, i32, i32) {
    %c0_i32 = arith.constant 0 : i32
    %c0_i32_0 = arith.constant 0 : i32
    %c0_i32_1 = arith.constant 0 : i32
    return %arg0, %c0_i32, %c0_i32_0 : i32, i32, i32
  }
}

</mosaic_0001>

<llo_original>
// kernel: rel_loss.1
$region0: #{rel_loss.1}
  #allocation0 [shape = 'u32[]', space=smem, size = 0x4, offset = 0x4, fixed_abs, tag = 'smem constant byte address 0x4 - core index']
  #allocation1 [shape = 'u32[144,128]{1,0:T(1,128)}', space=vmem, size = 0x12000, scoped, tag = 'internal scratch']
  #allocation2 [shape = 's32[1]{0}', space=sflag, size = 0x4, scoped, tag = 'scoped memory for rel_loss.1']
  #allocation3 [shape = 's32[1]{0:T(128)S(6)}', space=smem, size = 0x200, scoped, tag = 'prefetched SMEM operand 0']
  #allocation4 [shape = 's32[1]{0:T(128)S(6)}', space=smem, size = 0x200, scoped, tag = 'prefetched SMEM operand 1']
  %s0 = inlined_call_operand.<no memory space> [shape: s32[1], index: 0, kind: input, shape index: {}, may-alias: {0,1}]
  %s1 = inlined_call_operand.<no memory space> [shape: s32[1], index: 1, kind: input, shape index: {}, may-alias: {0,1}]
  %s2 = inlined_call_operand.vmem [shape: f32[128,32], index: 2, kind: input, shape index: {}, may-alias: {2,3}]
  %s3 = inlined_call_operand.vmem [shape: f32[128,32], index: 3, kind: input, shape index: {}, may-alias: {2,3}]
  %s4 = inlined_call_operand.vmem [shape: f32[128,16], index: 4, kind: input, shape index: {}, may-alias: {4,5}]
  %s5 = inlined_call_operand.vmem [shape: f32[128,16], index: 5, kind: input, shape index: {}, may-alias: {4,5}]
  %s6 = inlined_call_operand.vmem [shape: f32[128,1], index: 6, kind: input, shape index: {}]
  %s7 = inlined_call_operand.vmem [shape: f32[128,1], index: 7, kind: input, shape index: {}]
  %s8 = inlined_call_operand.vmem [shape: f32[1,128], index: 8, kind: input, shape index: {}]
  %s9 = inlined_call_operand.vmem [shape: f32[1,128], index: 9, kind: input, shape index: {}]
  %s10 = inlined_call_operand.vmem [shape: f32[1,8,128], index: 10, kind: output, shape index: {}]
  %s11 = sld [smem:[#allocation0]]
  $region42: #{rel_loss.1} parent=0
    _
  %s13 = ssub.s32 1, %s11
  %s14 = scalar_select 0, %s13, %s11
  %15 = sst [smem:[#allocation3]] %s0
  %16 = sst [smem:[#allocation4]] %s1
  // Predicated region
  $region2: #{rel_loss.1} parent=0 // pred_check
    _
  $region3: #{rel_loss.1} parent=0 // pred_check_branch
    %18 = sbr.rel (0) target = $region5
  $region4: #{rel_loss.1} parent=0 // pred_region
    %s19 = sld [smem:[#allocation3]]
    %s20 = smul.u32 16, %s19
    %p21 = scmp.lt.s32.totalorder %s20, 15
    %s22 = scalar_select %p21, %s20, 15
    %s23 = smul.addr %s22, 8
    %s24 = scalar_lea.vmem %s2, %s23
    %s25 = sld [smem:[#allocation3]]
    %s26 = smul.u32 16, %s25
  $region5: #{rel_loss.1} parent=0 // pred_fallthru
    _
  // Predicated region
  $region6: #{rel_loss.1} parent=0 // pred_check
    _
  $region7: #{rel_loss.1} parent=0 // pred_check_branch
    %28 = sbr.rel (0) target = $region9
  $region8: #{rel_loss.1} parent=0 // pred_region
    %s29 = sld [smem:[#allocation4]]
    %s30 = smul.u32 16, %s29
    %p31 = scmp.lt.s32.totalorder %s30, 15
    %s32 = scalar_select %p31, %s30, 15
    %s33 = smul.addr %s32, 8
    %s34 = scalar_lea.vmem %s3, %s33
    %s35 = sld [smem:[#allocation4]]
    %s36 = smul.u32 16, %s35
  $region9: #{rel_loss.1} parent=0 // pred_fallthru
    _
  // Predicated region
  $region10: #{rel_loss.1} parent=0 // pred_check
    _
  $region11: #{rel_loss.1} parent=0 // pred_check_branch
    %38 = sbr.rel (0) target = $region13
  $region12: #{rel_loss.1} parent=0 // pred_region
    %s39 = sld [smem:[#allocation3]]
    %s40 = smul.u32 16, %s39
    %p41 = scmp.lt.s32.totalorder %s40, 15
    %s42 = scalar_select %p41, %s40, 15
    %s43 = smul.addr %s42, 8
    %s44 = scalar_lea.vmem %s4, %s43
    %s45 = sld [smem:[#allocation3]]
    %s46 = smul.u32 16, %s45
  $region13: #{rel_loss.1} parent=0 // pred_fallthru
    _
  // Predicated region
  $region14: #{rel_loss.1} parent=0 // pred_check
    _
  $region15: #{rel_loss.1} parent=0 // pred_check_branch
    %48 = sbr.rel (0) target = $region17
  $region16: #{rel_loss.1} parent=0 // pred_region
    %s49 = sld [smem:[#allocation4]]
    %s50 = smul.u32 16, %s49
    %p51 = scmp.lt.s32.totalorder %s50, 15
    %s52 = scalar_select %p51, %s50, 15
    %s53 = smul.addr %s52, 8
    %s54 = scalar_lea.vmem %s5, %s53
    %s55 = sld [smem:[#allocation4]]
    %s56 = smul.u32 16, %s55
  $region17: #{rel_loss.1} parent=0 // pred_fallthru
    _
  // Predicated region
  $region18: #{rel_loss.1} parent=0 // pred_check
    _
  $region19: #{rel_loss.1} parent=0 // pred_check_branch
    %58 = sbr.rel (0) target = $region21
  $region20: #{rel_loss.1} parent=0 // pred_region
    %s59 = sld [smem:[#allocation3]]
    %s60 = smul.u32 16, %s59
    %p61 = scmp.lt.s32.totalorder %s60, 15
    %s62 = scalar_select %p61, %s60, 15
    %s63 = smul.addr %s62, 8
    %s64 = scalar_lea.vmem %s6, %s63
    %s65 = sld [smem:[#allocation3]]
    %s66 = smul.u32 16, %s65
  $region21: #{rel_loss.1} parent=0 // pred_fallthru
    _
  // Predicated region
  $region22: #{rel_loss.1} parent=0 // pred_check
    _
  $region23: #{rel_loss.1} parent=0 // pred_check_branch
    %68 = sbr.rel (0) target = $region25
  $region24: #{rel_loss.1} parent=0 // pred_region
    %s69 = sld [smem:[#allocation3]]
    %s70 = smul.u32 16, %s69
    %p71 = scmp.lt.s32.totalorder %s70, 15
    %s72 = scalar_select %p71, %s70, 15
    %s73 = smul.addr %s72, 8
    %s74 = scalar_lea.vmem %s7, %s73
    %s75 = sld [smem:[#allocation3]]
    %s76 = smul.u32 16, %s75
  $region25: #{rel_loss.1} parent=0 // pred_fallthru
    _
  // Predicated region
  $region26: #{rel_loss.1} parent=0 // pred_check
    _
  $region27: #{rel_loss.1} parent=0 // pred_check_branch
    %78 = sbr.rel (0) target = $region29
  $region28: #{rel_loss.1} parent=0 // pred_region
    %s79 = sld [smem:[#allocation4]]
    %p80 = scmp.lt.s32.totalorder %s79, 0
    %s81 = scalar_select %p80, %s79, 0
    %s82 = scalar_lea.vmem %s8, %s81
    %s83 = sld [smem:[#allocation4]]
  $region29: #{rel_loss.1} parent=0 // pred_fallthru
    _
  // Predicated region
  $region30: #{rel_loss.1} parent=0 // pred_check
    _
  $region31: #{rel_loss.1} parent=0 // pred_check_branch
    %85 = sbr.rel (0) target = $region33
  $region32: #{rel_loss.1} parent=0 // pred_region
    %s86 = sld [smem:[#allocation4]]
    %p87 = scmp.lt.s32.totalorder %s86, 0
    %s88 = scalar_select %p87, %s86, 0
    %s89 = scalar_lea.vmem %s9, %s88
    %s90 = sld [smem:[#allocation4]]
  $region33: #{rel_loss.1} parent=0 // pred_fallthru
    _
  %s91 = sld [smem:[#allocation3]]
  %s92 = smul.u32 16, %s91
  %p93 = scmp.lt.s32.totalorder %s92, 15
  %s94 = scalar_select %p93, %s92, 15
  %s95 = smul.addr %s94, 8
  %s96 = scalar_lea.vmem %s2, %s95
  %s97 = sld [smem:[#allocation4]]
  %s98 = smul.u32 16, %s97
  %p99 = scmp.lt.s32.totalorder %s98, 15
  %s100 = scalar_select %p99, %s98, 15
  %s101 = smul.addr %s100, 8
  %s102 = scalar_lea.vmem %s3, %s101
  %s103 = sld [smem:[#allocation3]]
  %s104 = smul.u32 16, %s103
  %p105 = scmp.lt.s32.totalorder %s104, 15
  %s106 = scalar_select %p105, %s104, 15
  %s107 = smul.addr %s106, 8
  %s108 = scalar_lea.vmem %s4, %s107
  %s109 = sld [smem:[#allocation4]]
  %s110 = smul.u32 16, %s109
  %p111 = scmp.lt.s32.totalorder %s110, 15
  %s112 = scalar_select %p111, %s110, 15
  %s113 = smul.addr %s112, 8
  %s114 = scalar_lea.vmem %s5, %s113
  %s115 = sld [smem:[#allocation3]]
  %s116 = smul.u32 16, %s115
  %p117 = scmp.lt.s32.totalorder %s116, 15
  %s118 = scalar_select %p117, %s116, 15
  %s119 = smul.addr %s118, 8
  %s120 = scalar_lea.vmem %s6, %s119
  %s121 = sld [smem:[#allocation3]]
  %s122 = smul.u32 16, %s121
  %p123 = scmp.lt.s32.totalorder %s122, 15
  %s124 = scalar_select %p123, %s122, 15
  %s125 = smul.addr %s124, 8
  %s126 = scalar_lea.vmem %s7, %s125
  %s127 = sld [smem:[#allocation4]]
  %p128 = scmp.lt.s32.totalorder %s127, 0
  %s129 = scalar_select %p128, %s127, 0
  %s130 = scalar_lea.vmem %s8, %s129
  %s131 = sld [smem:[#allocation4]]
  %p132 = scmp.lt.s32.totalorder %s131, 0
  %s133 = scalar_select %p132, %s131, 0
  %s134 = scalar_lea.vmem %s9, %s133
  %s135 = sld [smem:[#allocation3]]
  %s136 = smul.u32 16, %s135
  %p137 = scmp.lt.s32.totalorder %s136, 15
  %s138 = scalar_select %p137, %s136, 15
  %s139 = smul.addr %s138, 8
  %s140 = scalar_lea.vmem %s2, %s139
  %s141 = sld [smem:[#allocation3]]
  %s142 = smul.u32 16, %s141
  %s143 = sld [smem:[#allocation4]]
  %s144 = smul.u32 16, %s143
  %p145 = scmp.lt.s32.totalorder %s144, 15
  %s146 = scalar_select %p145, %s144, 15
  %s147 = smul.addr %s146, 8
  %s148 = scalar_lea.vmem %s3, %s147
  %s149 = sld [smem:[#allocation4]]
  %s150 = smul.u32 16, %s149
  %s151 = sld [smem:[#allocation3]]
  %s152 = smul.u32 16, %s151
  %p153 = scmp.lt.s32.totalorder %s152, 15
  %s154 = scalar_select %p153, %s152, 15
  %s155 = smul.addr %s154, 8
  %s156 = scalar_lea.vmem %s4, %s155
  %s157 = sld [smem:[#allocation3]]
  %s158 = smul.u32 16, %s157
  %s159 = sld [smem:[#allocation4]]
  %s160 = smul.u32 16, %s159
  %p161 = scmp.lt.s32.totalorder %s160, 15
  %s162 = scalar_select %p161, %s160, 15
  %s163 = smul.addr %s162, 8
  %s164 = scalar_lea.vmem %s5, %s163
  %s165 = sld [smem:[#allocation4]]
  %s166 = smul.u32 16, %s165
  %s167 = sld [smem:[#allocation3]]
  %s168 = smul.u32 16, %s167
  %p169 = scmp.lt.s32.totalorder %s168, 15
  %s170 = scalar_select %p169, %s168, 15
  %s171 = smul.addr %s170, 8
  %s172 = scalar_lea.vmem %s6, %s171
  %s173 = sld [smem:[#allocation3]]
  %s174 = smul.u32 16, %s173
  %s175 = sld [smem:[#allocation3]]
  %s176 = smul.u32 16, %s175
  %p177 = scmp.lt.s32.totalorder %s176, 15
  %s178 = scalar_select %p177, %s176, 15
  %s179 = smul.addr %s178, 8
  %s180 = scalar_lea.vmem %s7, %s179
  %s181 = sld [smem:[#allocation3]]
  %s182 = smul.u32 16, %s181
  %s183 = sld [smem:[#allocation4]]
  %p184 = scmp.lt.s32.totalorder %s183, 0
  %s185 = scalar_select %p184, %s183, 0
  %s186 = scalar_lea.vmem %s8, %s185
  %s187 = sld [smem:[#allocation4]]
  %s188 = sld [smem:[#allocation4]]
  %p189 = scmp.lt.s32.totalorder %s188, 0
  %s190 = scalar_select %p189, %s188, 0
  %s191 = scalar_lea.vmem %s9, %s190
  %s192 = sld [smem:[#allocation4]]
  %s193 = sld [smem:[#allocation3]]
  %s194 = sld [smem:[#allocation4]]
  %p195 = scmp.eq.s32.totalorder %s193, %s194
  %s196 = scalar_select %p195, 1.0, 2.0
  %v197 = vld [vmem:[%s186] sm:$0x1]
  %v198 = vld [vmem:[%s191] sm:$0x1]
  %s199 = smul.u32 %s194, 128
  %v200 = vlaneseq
  %v201 = vand.u32 %v200, 127
  %v202 = vstv %s199
  %v203 = vadd.s32 %v202, %v201
  %vm204 = vcmp.lt.s32.totalorder %v203, 8
  %v205 = vld [vmem:[%s140] sm:$0xff]
  %v206 = vld [vmem:[%s140 + $0x8] sm:$0xff]
  %v207 = vld [vmem:[%s140 + $0x10] sm:$0xff]
  %v208 = vld [vmem:[%s140 + $0x18] sm:$0xff]
  %v209 = vld [vmem:[%s140 + $0x20] sm:$0xff]
  %v210 = vld [vmem:[%s140 + $0x28] sm:$0xff]
  %v211 = vld [vmem:[%s140 + $0x30] sm:$0xff]
  %v212 = vld [vmem:[%s140 + $0x38] sm:$0xff]
  %v213 = vld [vmem:[%s156] sm:$0xff]
  %v214 = vld [vmem:[%s156 + $0x8] sm:$0xff]
  %v215 = vld [vmem:[%s156 + $0x10] sm:$0xff]
  %v216 = vld [vmem:[%s156 + $0x18] sm:$0xff]
  %v217 = vld [vmem:[%s156 + $0x20] sm:$0xff]
  %v218 = vld [vmem:[%s156 + $0x28] sm:$0xff]
  %v219 = vld [vmem:[%s156 + $0x30] sm:$0xff]
  %v220 = vld [vmem:[%s156 + $0x38] sm:$0xff]
  %v221 = vld [vmem:[%s148] sm:$0xff]
  %v222 = vld [vmem:[%s148 + $0x8] sm:$0xff]
  %v223 = vld [vmem:[%s148 + $0x10] sm:$0xff]
  %v224 = vld [vmem:[%s148 + $0x18] sm:$0xff]
  %v225 = vld [vmem:[%s148 + $0x20] sm:$0xff]
  %v226 = vld [vmem:[%s148 + $0x28] sm:$0xff]
  %v227 = vld [vmem:[%s148 + $0x30] sm:$0xff]
  %v228 = vld [vmem:[%s148 + $0x38] sm:$0xff]
  %v229 = vld [vmem:[%s148 + $0x40] sm:$0xff]
  %v230 = vld [vmem:[%s148 + $0x48] sm:$0xff]
  %v231 = vld [vmem:[%s148 + $0x50] sm:$0xff]
  %v232 = vld [vmem:[%s148 + $0x58] sm:$0xff]
  %v233 = vld [vmem:[%s148 + $0x60] sm:$0xff]
  %v234 = vld [vmem:[%s148 + $0x68] sm:$0xff]
  %v235 = vld [vmem:[%s148 + $0x70] sm:$0xff]
  %v236 = vld [vmem:[%s148 + $0x78] sm:$0xff]
  %v237 = vld [vmem:[%s164] sm:$0xff]
  %v238 = vld [vmem:[%s164 + $0x8] sm:$0xff]
  %v239 = vld [vmem:[%s164 + $0x10] sm:$0xff]
  %v240 = vld [vmem:[%s164 + $0x18] sm:$0xff]
  %v241 = vld [vmem:[%s164 + $0x20] sm:$0xff]
  %v242 = vld [vmem:[%s164 + $0x28] sm:$0xff]
  %v243 = vld [vmem:[%s164 + $0x30] sm:$0xff]
  %v244 = vld [vmem:[%s164 + $0x38] sm:$0xff]
  %v245 = vld [vmem:[%s164 + $0x40] sm:$0xff]
  %v246 = vld [vmem:[%s164 + $0x48] sm:$0xff]
  %v247 = vld [vmem:[%s164 + $0x50] sm:$0xff]
  %v248 = vld [vmem:[%s164 + $0x58] sm:$0xff]
  %v249 = vld [vmem:[%s164 + $0x60] sm:$0xff]
  %v250 = vld [vmem:[%s164 + $0x68] sm:$0xff]
  %v251 = vld [vmem:[%s164 + $0x70] sm:$0xff]
  %v252 = vld [vmem:[%s164 + $0x78] sm:$0xff]
  %v253 = vld [vmem:[%s172] sm:$0xff]
  %v254 = vld [vmem:[%s172 + $0x8] sm:$0xff]
  %v255 = vld [vmem:[%s172 + $0x10] sm:$0xff]
  %v256 = vld [vmem:[%s172 + $0x18] sm:$0xff]
  %v257 = vld [vmem:[%s172 + $0x20] sm:$0xff]
  %v258 = vld [vmem:[%s172 + $0x28] sm:$0xff]
  %v259 = vld [vmem:[%s172 + $0x30] sm:$0xff]
  %v260 = vld [vmem:[%s172 + $0x38] sm:$0xff]
  %v261 = vld [vmem:[%s180] sm:$0xff]
  %v262 = vld [vmem:[%s180 + $0x8] sm:$0xff]
  %v263 = vld [vmem:[%s180 + $0x10] sm:$0xff]
  %v264 = vld [vmem:[%s180 + $0x18] sm:$0xff]
  %v265 = vld [vmem:[%s180 + $0x20] sm:$0xff]
  %v266 = vld [vmem:[%s180 + $0x28] sm:$0xff]
  %v267 = vld [vmem:[%s180 + $0x30] sm:$0xff]
  %v268 = vld [vmem:[%s180 + $0x38] sm:$0xff]
  %vm269 = vcmask 261120
  %v271 = vsel %vm269, %v205, 0
  %v274 = vsel %vm269, %v206, 0
  %v277 = vsel %vm269, %v207, 0
  %v280 = vsel %vm269, %v208, 0
  %v283 = vsel %vm269, %v209, 0
  %v286 = vsel %vm269, %v210, 0
  %v289 = vsel %vm269, %v211, 0
  %v292 = vsel %vm269, %v212, 0
  %v295 = vsel %vm269, %v221, 0
  %v298 = vsel %vm269, %v222, 0
  %v301 = vsel %vm269, %v223, 0
  %v304 = vsel %vm269, %v224, 0
  %v307 = vsel %vm269, %v225, 0
  %v310 = vsel %vm269, %v226, 0
  %v313 = vsel %vm269, %v227, 0
  %v316 = vsel %vm269, %v228, 0
  %v319 = vsel %vm269, %v229, 0
  %v322 = vsel %vm269, %v230, 0
  %v325 = vsel %vm269, %v231, 0
  %v328 = vsel %vm269, %v232, 0
  %v331 = vsel %vm269, %v233, 0
  %v334 = vsel %vm269, %v234, 0
  %v337 = vsel %vm269, %v235, 0
  %v340 = vsel %vm269, %v236, 0
  %342 = vmatprep.subr.mxu0 0.0
  %343 = vmatpush1.xpose.msra.mxu0 %v295
  %344 = vmatprep.subr.mxu0 0.0
  %345 = vmatpush1.xpose.msra.mxu0 %v298
  %346 = vmatprep.subr.mxu0 0.0
  %347 = vmatpush1.xpose.msra.mxu0 %v301
  %348 = vmatprep.subr.mxu0 0.0
  %349 = vmatpush1.xpose.msra.mxu0 %v304
  %350 = vmatprep.subr.mxu0 0.0
  %351 = vmatpush1.xpose.msra.mxu0 %v307
  %352 = vmatprep.subr.mxu0 0.0
  %353 = vmatpush1.xpose.msra.mxu0 %v310
  %354 = vmatprep.subr.mxu0 0.0
  %355 = vmatpush1.xpose.msra.mxu0 %v313
  %356 = vmatprep.subr.mxu0 0.0
  %357 = vmatpush1.xpose.msra.mxu0 %v316
  %358 = vmatprep.subr.mxu0 0.0
  %359 = vmatpush1.xpose.msra.mxu0 %v319
  %360 = vmatprep.subr.mxu0 0.0
  %361 = vmatpush1.xpose.msra.mxu0 %v322
  %362 = vmatprep.subr.mxu0 0.0
  %363 = vmatpush1.xpose.msra.mxu0 %v325
  %364 = vmatprep.subr.mxu0 0.0
  %365 = vmatpush1.xpose.msra.mxu0 %v328
  %366 = vmatprep.subr.mxu0 0.0
  %367 = vmatpush1.xpose.msra.mxu0 %v331
  %368 = vmatprep.subr.mxu0 0.0
  %369 = vmatpush1.xpose.msra.mxu0 %v334
  %370 = vmatprep.subr.mxu0 0.0
  %371 = vmatpush1.xpose.msra.mxu0 %v337
  %372 = vmatprep.subr.mxu0 0.0
  %373 = vmatpush1.xpose.msra.mxu0 %v340
  %374 = vmatprep.subr.mxu0 0.0
  %375 = vmatpush1.xpose.msra.mxu0 0.0
  %376 = vmatprep.subr.mxu0 0.0
  %377 = vmatpush1.xpose.msra.mxu0 0.0
  %378 = vmatprep.subr.mxu0 0.0
  %379 = vmatpush1.xpose.msra.mxu0 0.0
  %380 = vmatprep.subr.mxu0 0.0
  %381 = vmatpush1.xpose.msra.mxu0 0.0
  %382 = vmatprep.subr.mxu0 0.0
  %383 = vmatpush1.xpose.msra.mxu0 0.0
  %384 = vmatprep.subr.mxu0 0.0
  %385 = vmatpush1.xpose.msra.mxu0 0.0
  %386 = vmatprep.subr.mxu0 0.0
  %387 = vmatpush1.xpose.msra.mxu0 0.0
  %388 = vmatprep.subr.mxu0 0.0
  %389 = vmatpush1.xpose.msra.mxu0 0.0
  %390 = vmatprep.subr.mxu0 0.0
  %391 = vmatpush1.xpose.msra.mxu0 0.0
  %392 = vmatprep.subr.mxu0 0.0
  %393 = vmatpush1.xpose.msra.mxu0 0.0
  %394 = vmatprep.subr.mxu0 0.0
  %395 = vmatpush1.xpose.msra.mxu0 0.0
  %396 = vmatprep.subr.mxu0 0.0
  %397 = vmatpush1.xpose.msra.mxu0 0.0
  %398 = vmatprep.subr.mxu0 0.0
  %399 = vmatpush1.xpose.msra.mxu0 0.0
  %400 = vmatprep.subr.mxu0 0.0
  %401 = vmatpush1.xpose.msra.mxu0 0.0
  %402 = vmatprep.subr.mxu0 0.0
  %403 = vmatpush1.xpose.msra.mxu0 0.0
  %404 = vmatprep.subr.mxu0 0.0
  %405 = vmatpush1.xpose.msra.mxu0 0.0
  %406 = vmatprep.mubr.f32.mxu0 0.0
  %407 = vmatmul.mubr.f32.gmra.mrb[0].mxu0 %v271
  %v408 = vpop.f32.mrb[0].mxu0
  %v409 = vadd.f32 0.0, %v408
  %v410 = vpop.f32.mrb[0].mxu0
  %411 = vmatprep.mubr.f32.mxu0 0.0
  %412 = vmatmul.mubr.f32.gmra.mrb[0].mxu0 %v274
  %v413 = vpop.f32.mrb[0].mxu0
  %v414 = vadd.f32 0.0, %v413
  %v415 = vpop.f32.mrb[0].mxu0
  %416 = vmatprep.mubr.f32.mxu0 0.0
  %417 = vmatmul.mubr.f32.gmra.mrb[0].mxu0 %v277
  %v418 = vpop.f32.mrb[0].mxu0
  %v419 = vadd.f32 0.0, %v418
  %v420 = vpop.f32.mrb[0].mxu0
  %421 = vmatprep.mubr.f32.mxu0 0.0
  %422 = vmatmul.mubr.f32.gmra.mrb[0].mxu0 %v280
  %v423 = vpop.f32.mrb[0].mxu0
  %v424 = vadd.f32 0.0, %v423
  %v425 = vpop.f32.mrb[0].mxu0
  %426 = vmatprep.mubr.f32.mxu0 0.0
  %427 = vmatmul.mubr.f32.gmra.mrb[0].mxu0 %v283
  %v428 = vpop.f32.mrb[0].mxu0
  %v429 = vadd.f32 0.0, %v428
  %v430 = vpop.f32.mrb[0].mxu0
  %431 = vmatprep.mubr.f32.mxu0 0.0
  %432 = vmatmul.mubr.f32.gmra.mrb[0].mxu0 %v286
  %v433 = vpop.f32.mrb[0].mxu0
  %v434 = vadd.f32 0.0, %v433
  %v435 = vpop.f32.mrb[0].mxu0
  %436 = vmatprep.mubr.f32.mxu0 0.0
  %437 = vmatmul.mubr.f32.gmra.mrb[0].mxu0 %v289
  %v438 = vpop.f32.mrb[0].mxu0
  %v439 = vadd.f32 0.0, %v438
  %v440 = vpop.f32.mrb[0].mxu0
  %441 = vmatprep.mubr.f32.mxu0 0.0
  %442 = vmatmul.mubr.f32.gmra.mrb[0].mxu0 %v292
  %v443 = vpop.f32.mrb[0].mxu0
  %v444 = vadd.f32 0.0, %v443
  %v445 = vpop.f32.mrb[0].mxu0
  %446 = vdwg.mxu0
  %vm447 = vcmask 130048
  %v449 = vsel %vm447, %v213, 0
  %v452 = vsel %vm447, %v214, 0
  %v455 = vsel %vm447, %v215, 0
  %v458 = vsel %vm447, %v216, 0
  %v461 = vsel %vm447, %v217, 0
  %v464 = vsel %vm447, %v218, 0
  %v467 = vsel %vm447, %v219, 0
  %v470 = vsel %vm447, %v220, 0
  %v473 = vsel %vm447, %v237, 0
  %v476 = vsel %vm447, %v238, 0
  %v479 = vsel %vm447, %v239, 0
  %v482 = vsel %vm447, %v240, 0
  %v485 = vsel %vm447, %v241, 0
  %v488 = vsel %vm447, %v242, 0
  %v491 = vsel %vm447, %v243, 0
  %v494 = vsel %vm447, %v244, 0
  %v497 = vsel %vm447, %v245, 0
  %v500 = vsel %vm447, %v246, 0
  %v503 = vsel %vm447, %v247, 0
  %v506 = vsel %vm447, %v248, 0
  %v509 = vsel %vm447, %v249, 0
  %v512 = vsel %vm447, %v250, 0
  %v515 = vsel %vm447, %v251, 0
  %v518 = vsel %vm447, %v252, 0
  %520 = vmatprep.subr.mxu0 0.0
  %521 = vmatpush1.xpose.msra.mxu0 %v473
  %522 = vmatprep.subr.mxu0 0.0
  %523 = vmatpush1.xpose.msra.mxu0 %v476
  %524 = vmatprep.subr.mxu0 0.0
  %525 = vmatpush1.xpose.msra.mxu0 %v479
  %526 = vmatprep.subr.mxu0 0.0
  %527 = vmatpush1.xpose.msra.mxu0 %v482
  %528 = vmatprep.subr.mxu0 0.0
  %529 = vmatpush1.xpose.msra.mxu0 %v485
  %530 = vmatprep.subr.mxu0 0.0
  %531 = vmatpush1.xpose.msra.mxu0 %v488
  %532 = vmatprep.subr.mxu0 0.0
  %533 = vmatpush1.xpose.msra.mxu0 %v491
  %534 = vmatprep.subr.mxu0 0.0
  %535 = vmatpush1.xpose.msra.mxu0 %v494
  %536 = vmatprep.subr.mxu0 0.0
  %537 = vmatpush1.xpose.msra.mxu0 %v497
  %538 = vmatprep.subr.mxu0 0.0
  %539 = vmatpush1.xpose.msra.mxu0 %v500
  %540 = vmatprep.subr.mxu0 0.0
  %541 = vmatpush1.xpose.msra.mxu0 %v503
  %542 = vmatprep.subr.mxu0 0.0
  %543 = vmatpush1.xpose.msra.mxu0 %v506
  %544 = vmatprep.subr.mxu0 0.0
  %545 = vmatpush1.xpose.msra.mxu0 %v509
  %546 = vmatprep.subr.mxu0 0.0
  %547 = vmatpush1.xpose.msra.mxu0 %v512
  %548 = vmatprep.subr.mxu0 0.0
  %549 = vmatpush1.xpose.msra.mxu0 %v515
  %550 = vmatprep.subr.mxu0 0.0
  %551 = vmatpush1.xpose.msra.mxu0 %v518
  %552 = vmatprep.subr.mxu0 0.0
  %553 = vmatpush1.xpose.msra.mxu0 0.0
  %554 = vmatprep.subr.mxu0 0.0
  %555 = vmatpush1.xpose.msra.mxu0 0.0
  %556 = vmatprep.subr.mxu0 0.0
  %557 = vmatpush1.xpose.msra.mxu0 0.0
  %558 = vmatprep.subr.mxu0 0.0
  %559 = vmatpush1.xpose.msra.mxu0 0.0
  %560 = vmatprep.subr.mxu0 0.0
  %561 = vmatpush1.xpose.msra.mxu0 0.0
  %562 = vmatprep.subr.mxu0 0.0
  %563 = vmatpush1.xpose.msra.mxu0 0.0
  %564 = vmatprep.subr.mxu0 0.0
  %565 = vmatpush1.xpose.msra.mxu0 0.0
  %566 = vmatprep.subr.mxu0 0.0
  %567 = vmatpush1.xpose.msra.mxu0 0.0
  %568 = vmatprep.subr.mxu0 0.0
  %569 = vmatpush1.xpose.msra.mxu0 0.0
  %570 = vmatprep.subr.mxu0 0.0
  %571 = vmatpush1.xpose.msra.mxu0 0.0
  %572 = vmatprep.subr.mxu0 0.0
  %573 = vmatpush1.xpose.msra.mxu0 0.0
  %574 = vmatprep.subr.mxu0 0.0
  %575 = vmatpush1.xpose.msra.mxu0 0.0
  %576 = vmatprep.subr.mxu0 0.0
  %577 = vmatpush1.xpose.msra.mxu0 0.0
  %578 = vmatprep.subr.mxu0 0.0
  %579 = vmatpush1.xpose.msra.mxu0 0.0
  %580 = vmatprep.subr.mxu0 0.0
  %581 = vmatpush1.xpose.msra.mxu0 0.0
  %582 = vmatprep.subr.mxu0 0.0
  %583 = vmatpush1.xpose.msra.mxu0 0.0
  %584 = vmatprep.mubr.f32.mxu0 0.0
  %585 = vmatmul.mubr.f32.gmra.mrb[0].mxu0 %v449
  %v586 = vpop.f32.mrb[0].mxu0
  %v587 = vadd.f32 0.0, %v586
  %v588 = vpop.f32.mrb[0].mxu0
  %589 = vmatprep.mubr.f32.mxu0 0.0
  %590 = vmatmul.mubr.f32.gmra.mrb[0].mxu0 %v452
  %v591 = vpop.f32.mrb[0].mxu0
  %v592 = vadd.f32 0.0, %v591
  %v593 = vpop.f32.mrb[0].mxu0
  %594 = vmatprep.mubr.f32.mxu0 0.0
  %595 = vmatmul.mubr.f32.gmra.mrb[0].mxu0 %v455
  %v596 = vpop.f32.mrb[0].mxu0
  %v597 = vadd.f32 0.0, %v596
  %v598 = vpop.f32.mrb[0].mxu0
  %599 = vmatprep.mubr.f32.mxu0 0.0
  %600 = vmatmul.mubr.f32.gmra.mrb[0].mxu0 %v458
  %v601 = vpop.f32.mrb[0].mxu0
  %v602 = vadd.f32 0.0, %v601
  %v603 = vpop.f32.mrb[0].mxu0
  %604 = vmatprep.mubr.f32.mxu0 0.0
  %605 = vmatmul.mubr.f32.gmra.mrb[0].mxu0 %v461
  %v606 = vpop.f32.mrb[0].mxu0
  %v607 = vadd.f32 0.0, %v606
  %v608 = vpop.f32.mrb[0].mxu0
  %609 = vmatprep.mubr.f32.mxu0 0.0
  %610 = vmatmul.mubr.f32.gmra.mrb[0].mxu0 %v464
  %v611 = vpop.f32.mrb[0].mxu0
  %v612 = vadd.f32 0.0, %v611
  %v613 = vpop.f32.mrb[0].mxu0
  %614 = vmatprep.mubr.f32.mxu0 0.0
  %615 = vmatmul.mubr.f32.gmra.mrb[0].mxu0 %v467
  %v616 = vpop.f32.mrb[0].mxu0
  %v617 = vadd.f32 0.0, %v616
  %v618 = vpop.f32.mrb[0].mxu0
  %619 = vmatprep.mubr.f32.mxu0 0.0
  %620 = vmatmul.mubr.f32.gmra.mrb[0].mxu0 %v470
  %v621 = vpop.f32.mrb[0].mxu0
  %v622 = vadd.f32 0.0, %v621
  %v623 = vpop.f32.mrb[0].mxu0
  %624 = vdwg.mxu0
  %626 = vset.pattern.permute.xlu0 0
  %627 = vperm.xlu0 %626, %v253
  %v628 = vpop.permute.xlu0 %627
  %631 = vset.pattern.permute.xlu0 0
  %632 = vperm.xlu0 %631, %v254
  %v633 = vpop.permute.xlu0 %632
  %636 = vset.pattern.permute.xlu0 0
  %637 = vperm.xlu0 %636, %v255
  %v638 = vpop.permute.xlu0 %637
  %641 = vset.pattern.permute.xlu0 0
  %642 = vperm.xlu0 %641, %v256
  %v643 = vpop.permute.xlu0 %642
  %646 = vset.pattern.permute.xlu0 0
  %647 = vperm.xlu0 %646, %v257
  %v648 = vpop.permute.xlu0 %647
  %651 = vset.pattern.permute.xlu0 0
  %652 = vperm.xlu0 %651, %v258
  %v653 = vpop.permute.xlu0 %652
  %656 = vset.pattern.permute.xlu0 0
  %657 = vperm.xlu0 %656, %v259
  %v658 = vpop.permute.xlu0 %657
  %661 = vset.pattern.permute.xlu0 0
  %662 = vperm.xlu0 %661, %v260
  %v663 = vpop.permute.xlu0 %662
  %v666 = vlaneseq
  %v667 = vshrl.u32 %v666, 7
  %v668 = vsub.s32 0, %v667
  %v669 = vrot.slane %v197, %v668
  %v671 = vadd.f32 %v628, %v669
  %v672 = vadd.f32 %v633, %v669
  %v673 = vadd.f32 %v638, %v669
  %v674 = vadd.f32 %v643, %v669
  %v675 = vadd.f32 %v648, %v669
  %v676 = vadd.f32 %v653, %v669
  %v677 = vadd.f32 %v658, %v669
  %v678 = vadd.f32 %v663, %v669
  %v679 = vmul.f32 %v409, 2.0
  %v680 = vmul.f32 %v414, 2.0
  %v681 = vmul.f32 %v419, 2.0
  %v682 = vmul.f32 %v424, 2.0
  %v683 = vmul.f32 %v429, 2.0
  %v684 = vmul.f32 %v434, 2.0
  %v685 = vmul.f32 %v439, 2.0
  %v686 = vmul.f32 %v444, 2.0
  %v687 = vsub.f32 %v671, %v679
  %v688 = vsub.f32 %v672, %v680
  %v689 = vsub.f32 %v673, %v681
  %v690 = vsub.f32 %v674, %v682
  %v691 = vsub.f32 %v675, %v683
  %v692 = vsub.f32 %v676, %v684
  %v693 = vsub.f32 %v677, %v685
  %v694 = vsub.f32 %v678, %v686
  %v695 = vmax.f32 %v687, 1e-12
  %v696 = vmax.f32 %v688, 1e-12
  %v697 = vmax.f32 %v689, 1e-12
  %v698 = vmax.f32 %v690, 1e-12
  %v699 = vmax.f32 %v691, 1e-12
  %v700 = vmax.f32 %v692, 1e-12
  %v701 = vmax.f32 %v693, 1e-12
  %v702 = vmax.f32 %v694, 1e-12
  %704 = vset.pattern.permute.xlu0 0
  %705 = vperm.xlu0 %704, %v261
  %v706 = vpop.permute.xlu0 %705
  %709 = vset.pattern.permute.xlu0 0
  %710 = vperm.xlu0 %709, %v262
  %v711 = vpop.permute.xlu0 %710
  %714 = vset.pattern.permute.xlu0 0
  %715 = vperm.xlu0 %714, %v263
  %v716 = vpop.permute.xlu0 %715
  %719 = vset.pattern.permute.xlu0 0
  %720 = vperm.xlu0 %719, %v264
  %v721 = vpop.permute.xlu0 %720
  %724 = vset.pattern.permute.xlu0 0
  %725 = vperm.xlu0 %724, %v265
  %v726 = vpop.permute.xlu0 %725
  %729 = vset.pattern.permute.xlu0 0
  %730 = vperm.xlu0 %729, %v266
  %v731 = vpop.permute.xlu0 %730
  %734 = vset.pattern.permute.xlu0 0
  %735 = vperm.xlu0 %734, %v267
  %v736 = vpop.permute.xlu0 %735
  %739 = vset.pattern.permute.xlu0 0
  %740 = vperm.xlu0 %739, %v268
  %v741 = vpop.permute.xlu0 %740
  %v744 = vlaneseq
  %v745 = vshrl.u32 %v744, 7
  %v746 = vsub.s32 0, %v745
  %v747 = vrot.slane %v198, %v746
  %v749 = vadd.f32 %v706, %v747
  %v750 = vadd.f32 %v711, %v747
  %v751 = vadd.f32 %v716, %v747
  %v752 = vadd.f32 %v721, %v747
  %v753 = vadd.f32 %v726, %v747
  %v754 = vadd.f32 %v731, %v747
  %v755 = vadd.f32 %v736, %v747
  %v756 = vadd.f32 %v741, %v747
  %v757 = vmul.f32 %v587, 2.0
  %v758 = vmul.f32 %v592, 2.0
  %v759 = vmul.f32 %v597, 2.0
  %v760 = vmul.f32 %v602, 2.0
  %v761 = vmul.f32 %v607, 2.0
  %v762 = vmul.f32 %v612, 2.0
  %v763 = vmul.f32 %v617, 2.0
  %v764 = vmul.f32 %v622, 2.0
  %v765 = vsub.f32 %v749, %v757
  %v766 = vsub.f32 %v750, %v758
  %v767 = vsub.f32 %v751, %v759
  %v768 = vsub.f32 %v752, %v760
  %v769 = vsub.f32 %v753, %v761
  %v770 = vsub.f32 %v754, %v762
  %v771 = vsub.f32 %v755, %v763
  %v772 = vsub.f32 %v756, %v764
  %v773 = vmax.f32 %v765, 1e-12
  %v774 = vmax.f32 %v766, 1e-12
  %v775 = vmax.f32 %v767, 1e-12
  %v776 = vmax.f32 %v768, 1e-12
  %v777 = vmax.f32 %v769, 1e-12
  %v778 = vmax.f32 %v770, 1e-12
  %v779 = vmax.f32 %v771, 1e-12
  %v780 = vmax.f32 %v772, 1e-12
  %v781 = vadd.f32 %v695, %v773
  %v782 = vadd.f32 %v696, %v774
  %v783 = vadd.f32 %v697, %v775
  %v784 = vadd.f32 %v698, %v776
  %v785 = vadd.f32 %v699, %v777
  %v786 = vadd.f32 %v700, %v778
  %v787 = vadd.f32 %v701, %v779
  %v788 = vadd.f32 %v702, %v780
  %v789 = vmul.f32 %v695, %v773
  %v790 = vmul.f32 %v696, %v774
  %v791 = vmul.f32 %v697, %v775
  %v792 = vmul.f32 %v698, %v776
  %v793 = vmul.f32 %v699, %v777
  %v794 = vmul.f32 %v700, %v778
  %v795 = vmul.f32 %v701, %v779
  %v796 = vmul.f32 %v702, %v780
  %v797 = vrsqrt.pop %v789
  %v798 = vmul.f32 %v789, %v797
  %vm799 = vcmp.eq.f32.partialorder %v789, inf
  %v800 = vsel %vm799, %v789, %v798
  %vm801 = vcmp.eq.f32.partialorder %v789, 0.0
  %v802 = vand.u32 %v789, 2147483648
  %v803 = vsel %vm801, %v802, %v800
  %v804 = vrsqrt.pop %v790
  %v805 = vmul.f32 %v790, %v804
  %vm806 = vcmp.eq.f32.partialorder %v790, inf
  %v807 = vsel %vm806, %v790, %v805
  %vm808 = vcmp.eq.f32.partialorder %v790, 0.0
  %v809 = vand.u32 %v790, 2147483648
  %v810 = vsel %vm808, %v809, %v807
  %v811 = vrsqrt.pop %v791
  %v812 = vmul.f32 %v791, %v811
  %vm813 = vcmp.eq.f32.partialorder %v791, inf
  %v814 = vsel %vm813, %v791, %v812
  %vm815 = vcmp.eq.f32.partialorder %v791, 0.0
  %v816 = vand.u32 %v791, 2147483648
  %v817 = vsel %vm815, %v816, %v814
  %v818 = vrsqrt.pop %v792
  %v819 = vmul.f32 %v792, %v818
  %vm820 = vcmp.eq.f32.partialorder %v792, inf
  %v821 = vsel %vm820, %v792, %v819
  %vm822 = vcmp.eq.f32.partialorder %v792, 0.0
  %v823 = vand.u32 %v792, 2147483648
  %v824 = vsel %vm822, %v823, %v821
  %v825 = vrsqrt.pop %v793
  %v826 = vmul.f32 %v793, %v825
  %vm827 = vcmp.eq.f32.partialorder %v793, inf
  %v828 = vsel %vm827, %v793, %v826
  %vm829 = vcmp.eq.f32.partialorder %v793, 0.0
  %v830 = vand.u32 %v793, 2147483648
  %v831 = vsel %vm829, %v830, %v828
  %v832 = vrsqrt.pop %v794
  %v833 = vmul.f32 %v794, %v832
  %vm834 = vcmp.eq.f32.partialorder %v794, inf
  %v835 = vsel %vm834, %v794, %v833
  %vm836 = vcmp.eq.f32.partialorder %v794, 0.0
  %v837 = vand.u32 %v794, 2147483648
  %v838 = vsel %vm836, %v837, %v835
  %v839 = vrsqrt.pop %v795
  %v840 = vmul.f32 %v795, %v839
  %vm841 = vcmp.eq.f32.partialorder %v795, inf
  %v842 = vsel %vm841, %v795, %v840
  %vm843 = vcmp.eq.f32.partialorder %v795, 0.0
  %v844 = vand.u32 %v795, 2147483648
  %v845 = vsel %vm843, %v844, %v842
  %v846 = vrsqrt.pop %v796
  %v847 = vmul.f32 %v796, %v846
  %vm848 = vcmp.eq.f32.partialorder %v796, inf
  %v849 = vsel %vm848, %v796, %v847
  %vm850 = vcmp.eq.f32.partialorder %v796, 0.0
  %v851 = vand.u32 %v796, 2147483648
  %v852 = vsel %vm850, %v851, %v849
  %v853 = vmul.f32 %v803, 2.0
  %v854 = vmul.f32 %v810, 2.0
  %v855 = vmul.f32 %v817, 2.0
  %v856 = vmul.f32 %v824, 2.0
  %v857 = vmul.f32 %v831, 2.0
  %v858 = vmul.f32 %v838, 2.0
  %v859 = vmul.f32 %v845, 2.0
  %v860 = vmul.f32 %v852, 2.0
  %v861 = vsub.f32 %v781, %v853
  %v862 = vsub.f32 %v782, %v854
  %v863 = vsub.f32 %v783, %v855
  %v864 = vsub.f32 %v784, %v856
  %v865 = vsub.f32 %v785, %v857
  %v866 = vsub.f32 %v786, %v858
  %v867 = vsub.f32 %v787, %v859
  %v868 = vsub.f32 %v788, %v860
  %s869 = smul.u32 %s193, 128
  %v870 = vlaneseq
  %v871 = vshrl.u32 %v870, 7
  %v872 = vadd.s32 %v871, 8
  %v873 = vadd.s32 %v871, 16
  %v874 = vadd.s32 %v871, 24
  %v875 = vadd.s32 %v871, 32
  %v876 = vadd.s32 %v871, 40
  %v877 = vadd.s32 %v871, 48
  %v878 = vadd.s32 %v871, 56
  %v879 = vstv %s869
  %v880 = vadd.s32 %v879, %v871
  %v881 = vadd.s32 %v879, %v872
  %v882 = vadd.s32 %v879, %v873
  %v883 = vadd.s32 %v879, %v874
  %v884 = vadd.s32 %v879, %v875
  %v885 = vadd.s32 %v879, %v876
  %v886 = vadd.s32 %v879, %v877
  %v887 = vadd.s32 %v879, %v878
  %vm888 = vcmp.lt.s32.totalorder %v880, 8
  %vm889 = vcmp.lt.s32.totalorder %v881, 8
  %vm890 = vcmp.lt.s32.totalorder %v882, 8
  %vm891 = vcmp.lt.s32.totalorder %v883, 8
  %vm892 = vcmp.lt.s32.totalorder %v884, 8
  %vm893 = vcmp.lt.s32.totalorder %v885, 8
  %vm894 = vcmp.lt.s32.totalorder %v886, 8
  %vm895 = vcmp.lt.s32.totalorder %v887, 8
  %v896 = vsel %vm888, 1, 0
  %v897 = vsel %vm889, 1, 0
  %v898 = vsel %vm890, 1, 0
  %v899 = vsel %vm891, 1, 0
  %v900 = vsel %vm892, 1, 0
  %v901 = vsel %vm893, 1, 0
  %v902 = vsel %vm894, 1, 0
  %v903 = vsel %vm895, 1, 0
  %vm904 = vcmp.eq.s32.totalorder %v896, 1
  %vm905 = vcmp.eq.s32.totalorder %v897, 1
  %vm906 = vcmp.eq.s32.totalorder %v898, 1
  %vm907 = vcmp.eq.s32.totalorder %v899, 1
  %vm908 = vcmp.eq.s32.totalorder %v900, 1
  %vm909 = vcmp.eq.s32.totalorder %v901, 1
  %vm910 = vcmp.eq.s32.totalorder %v902, 1
  %vm911 = vcmp.eq.s32.totalorder %v903, 1
  %v912 = vsel %vm204, 1, 0
  %vm913 = vcmp.eq.s32.totalorder %v912, 1
  %vm914 = vmand %vm904, %vm913
  %vm915 = vmand %vm905, %vm913
  %vm916 = vmand %vm906, %vm913
  %vm917 = vmand %vm907, %vm913
  %vm918 = vmand %vm908, %vm913
  %vm919 = vmand %vm909, %vm913
  %vm920 = vmand %vm910, %vm913
  %vm921 = vmand %vm911, %vm913
  %v922 = vsel %vm914, %v861, 0.0
  %v923 = vsel %vm915, %v862, 0.0
  %v924 = vsel %vm916, %v863, 0.0
  %v925 = vsel %vm917, %v864, 0.0
  %v926 = vsel %vm918, %v865, 0.0
  %v927 = vsel %vm919, %v866, 0.0
  %v928 = vsel %vm920, %v867, 0.0
  %v929 = vsel %vm921, %v868, 0.0
  %v930 = vadd.f32 %v922, %v923
  %v931 = vadd.f32 %v930, %v924
  %v932 = vadd.f32 %v931, %v925
  %v933 = vadd.f32 %v932, %v926
  %v934 = vadd.f32 %v933, %v927
  %v935 = vadd.f32 %v934, %v928
  %v936 = vadd.f32 %v935, %v929
  %v937 = vadd.f32 %v936, 0.0
  %v938 = vld [vmem:[%s140 + $0x40] sm:$0xff]
  %v939 = vld [vmem:[%s140 + $0x48] sm:$0xff]
  %v940 = vld [vmem:[%s140 + $0x50] sm:$0xff]
  %v941 = vld [vmem:[%s140 + $0x58] sm:$0xff]
  %v942 = vld [vmem:[%s140 + $0x60] sm:$0xff]
  %v943 = vld [vmem:[%s140 + $0x68] sm:$0xff]
  %v944 = vld [vmem:[%s140 + $0x70] sm:$0xff]
  %v945 = vld [vmem:[%s140 + $0x78] sm:$0xff]
  %v946 = vld [vmem:[%s156 + $0x40] sm:$0xff]
  %v947 = vld [vmem:[%s156 + $0x48] sm:$0xff]
  %v948 = vld [vmem:[%s156 + $0x50] sm:$0xff]
  %v949 = vld [vmem:[%s156 + $0x58] sm:$0xff]
  %v950 = vld [vmem:[%s156 + $0x60] sm:$0xff]
  %v951 = vld [vmem:[%s156 + $0x68] sm:$0xff]
  %v952 = vld [vmem:[%s156 + $0x70] sm:$0xff]
  %v953 = vld [vmem:[%s156 + $0x78] sm:$0xff]
  %v954 = vld [vmem:[%s172 + $0x40] sm:$0xff]
  %v955 = vld [vmem:[%s172 + $0x48] sm:$0xff]
  %v956 = vld [vmem:[%s172 + $0x50] sm:$0xff]
  %v957 = vld [vmem:[%s172 + $0x58] sm:$0xff]
  %v958 = vld [vmem:[%s172 + $0x60] sm:$0xff]
  %v959 = vld [vmem:[%s172 + $0x68] sm:$0xff]
  %v960 = vld [vmem:[%s172 + $0x70] sm:$0xff]
  %v961 = vld [vmem:[%s172 + $0x78] sm:$0xff]
  %v962 = vld [vmem:[%s180 + $0x40] sm:$0xff]
  %v963 = vld [vmem:[%s180 + $0x48] sm:$0xff]
  %v964 = vld [vmem:[%s180 + $0x50] sm:$0xff]
  %v965 = vld [vmem:[%s180 + $0x58] sm:$0xff]
  %v966 = vld [vmem:[%s180 + $0x60] sm:$0xff]
  %v967 = vld [vmem:[%s180 + $0x68] sm:$0xff]
  %v968 = vld [vmem:[%s180 + $0x70] sm:$0xff]
  %v969 = vld [vmem:[%s180 + $0x78] sm:$0xff]
  %v971 = vsel %vm269, %v938, 0
  %v974 = vsel %vm269, %v939, 0
  %v977 = vsel %vm269, %v940, 0
  %v980 = vsel %vm269, %v941, 0
  %v983 = vsel %vm269, %v942, 0
  %v986 = vsel %vm269, %v943, 0
  %v989 = vsel %vm269, %v944, 0
  %v992 = vsel %vm269, %v945, 0
  %994 = vmatprep.subr.mxu0 0.0
  %995 = vmatpush1.xpose.msra.mxu0 %v295
  %996 = vmatprep.subr.mxu0 0.0
  %997 = vmatpush1.xpose.msra.mxu0 %v298
  %998 = vmatprep.subr.mxu0 0.0
  %999 = vmatpush1.xpose.msra.mxu0 %v301
  %1000 = vmatprep.subr.mxu0 0.0
  %1001 = vmatpush1.xpose.msra.mxu0 %v304
  %1002 = vmatprep.subr.mxu0 0.0
  %1003 = vmatpush1.xpose.msra.mxu0 %v307
  %1004 = vmatprep.subr.mxu0 0.0
  %1005 = vmatpush1.xpose.msra.mxu0 %v310
  %1006 = vmatprep.subr.mxu0 0.0
  %1007 = vmatpush1.xpose.msra.mxu0 %v313
  %1008 = vmatprep.subr.mxu0 0.0
  %1009 = vmatpush1.xpose.msra.mxu0 %v316
  %1010 = vmatprep.subr.mxu0 0.0
  %1011 = vmatpush1.xpose.msra.mxu0 %v319
  %1012 = vmatprep.subr.mxu0 0.0
  %1013 = vmatpush1.xpose.msra.mxu0 %v322
  %1014 = vmatprep.subr.mxu0 0.0
  %1015 = vmatpush1.xpose.msra.mxu0 %v325
  %1016 = vmatprep.subr.mxu0 0.0
  %1017 = vmatpush1.xpose.msra.mxu0 %v328
  %1018 = vmatprep.subr.mxu0 0.0
  %1019 = vmatpush1.xpose.msra.mxu0 %v331
  %1020 = vmatprep.subr.mxu0 0.0
  %1021 = vmatpush1.xpose.msra.mxu0 %v334
  %1022 = vmatprep.subr.mxu0 0.0
  %1023 = vmatpush1.xpose.msra.mxu0 %v337
  %1024 = vmatprep.subr.mxu0 0.0
  %1025 = vmatpush1.xpose.msra.mxu0 %v340
  %1026 = vmatprep.subr.mxu0 0.0
  %1027 = vmatpush1.xpose.msra.mxu0 0.0
  %1028 = vmatprep.subr.mxu0 0.0
  %1029 = vmatpush1.xpose.msra.mxu0 0.0
  %1030 = vmatprep.subr.mxu0 0.0
  %1031 = vmatpush1.xpose.msra.mxu0 0.0
  %1032 = vmatprep.subr.mxu0 0.0
  %1033 = vmatpush1.xpose.msra.mxu0 0.0
  %1034 = vmatprep.subr.mxu0 0.0
  %1035 = vmatpush1.xpose.msra.mxu0 0.0
  %1036 = vmatprep.subr.mxu0 0.0
  %1037 = vmatpush1.xpose.msra.mxu0 0.0
  %1038 = vmatprep.subr.mxu0 0.0
  %1039 = vmatpush1.xpose.msra.mxu0 0.0
  %1040 = vmatprep.subr.mxu0 0.0
  %1041 = vmatpush1.xpose.msra.mxu0 0.0
  %1042 = vmatprep.subr.mxu0 0.0
  %1043 = vmatpush1.xpose.msra.mxu0 0.0
  %1044 = vmatprep.subr.mxu0 0.0
  %1045 = vmatpush1.xpose.msra.mxu0 0.0
  %1046 = vmatprep.subr.mxu0 0.0
  %1047 = vmatpush1.xpose.msra.mxu0 0.0
  %1048 = vmatprep.subr.mxu0 0.0
  %1049 = vmatpush1.xpose.msra.mxu0 0.0
  %1050 = vmatprep.subr.mxu0 0.0
  %1051 = vmatpush1.xpose.msra.mxu0 0.0
  %1052 = vmatprep.subr.mxu0 0.0
  %1053 = vmatpush1.xpose.msra.mxu0 0.0
  %1054 = vmatprep.subr.mxu0 0.0
  %1055 = vmatpush1.xpose.msra.mxu0 0.0
  %1056 = vmatprep.subr.mxu0 0.0
  %1057 = vmatpush1.xpose.msra.mxu0 0.0
  %1058 = vmatprep.mubr.f32.mxu0 0.0
  %1059 = vmatmul.mubr.f32.gmra.mrb[0].mxu0 %v971
  %v1060 = vpop.f32.mrb[0].mxu0
  %v1061 = vadd.f32 0.0, %v1060
  %v1062 = vpop.f32.mrb[0].mxu0
  %1063 = vmatprep.mubr.f32.mxu0 0.0
  %1064 = vmatmul.mubr.f32.gmra.mrb[0].mxu0 %v974
  %v1065 = vpop.f32.mrb[0].mxu0
  %v1066 = vadd.f32 0.0, %v1065
  %v1067 = vpop.f32.mrb[0].mxu0
  %1068 = vmatprep.mubr.f32.mxu0 0.0
  %1069 = vmatmul.mubr.f32.gmra.mrb[0].mxu0 %v977
  %v1070 = vpop.f32.mrb[0].mxu0
  %v1071 = vadd.f32 0.0, %v1070
  %v1072 = vpop.f32.mrb[0].mxu0
  %1073 = vmatprep.mubr.f32.mxu0 0.0
  %1074 = vmatmul.mubr.f32.gmra.mrb[0].mxu0 %v980
  %v1075 = vpop.f32.mrb[0].mxu0
  %v1076 = vadd.f32 0.0, %v1075
  %v1077 = vpop.f32.mrb[0].mxu0
  %1078 = vmatprep.mubr.f32.mxu0 0.0
  %1079 = vmatmul.mubr.f32.gmra.mrb[0].mxu0 %v983
  %v1080 = vpop.f32.mrb[0].mxu0
  %v1081 = vadd.f32 0.0, %v1080
  %v1082 = vpop.f32.mrb[0].mxu0
  %1083 = vmatprep.mubr.f32.mxu0 0.0
  %1084 = vmatmul.mubr.f32.gmra.mrb[0].mxu0 %v986
  %v1085 = vpop.f32.mrb[0].mxu0
  %v1086 = vadd.f32 0.0, %v1085
  %v1087 = vpop.f32.mrb[0].mxu0
  %1088 = vmatprep.mubr.f32.mxu0 0.0
  %1089 = vmatmul.mubr.f32.gmra.mrb[0].mxu0 %v989
  %v1090 = vpop.f32.mrb[0].mxu0
  %v1091 = vadd.f32 0.0, %v1090
  %v1092 = vpop.f32.mrb[0].mxu0
  %1093 = vmatprep.mubr.f32.mxu0 0.0
  %1094 = vmatmul.mubr.f32.gmra.mrb[0].mxu0 %v992
  %v1095 = vpop.f32.mrb[0].mxu0
  %v1096 = vadd.f32 0.0, %v1095
  %v1097 = vpop.f32.mrb[0].mxu0
  %1098 = vdwg.mxu0
  %v1100 = vsel %vm447, %v946, 0
  %v1103 = vsel %vm447, %v947, 0
  %v1106 = vsel %vm447, %v948, 0
  %v1109 = vsel %vm447, %v949, 0
  %v1112 = vsel %vm447, %v950, 0
  %v1115 = vsel %vm447, %v951, 0
  %v1118 = vsel %vm447, %v952, 0
  %v1121 = vsel %vm447, %v953, 0
  %1123 = vmatprep.subr.mxu0 0.0
  %1124 = vmatpush1.xpose.msra.mxu0 %v473
  %1125 = vmatprep.subr.mxu0 0.0
  %1126 = vmatpush1.xpose.msra.mxu0 %v476
  %1127 = vmatprep.subr.mxu0 0.0
  %1128 = vmatpush1.xpose.msra.mxu0 %v479
  %1129 = vmatprep.subr.mxu0 0.0
  %1130 = vmatpush1.xpose.msra.mxu0 %v482
  %1131 = vmatprep.subr.mxu0 0.0
  %1132 = vmatpush1.xpose.msra.mxu0 %v485
  %1133 = vmatprep.subr.mxu0 0.0
  %1134 = vmatpush1.xpose.msra.mxu0 %v488
  %1135 = vmatprep.subr.mxu0 0.0
  %1136 = vmatpush1.xpose.msra.mxu0 %v491
  %1137 = vmatprep.subr.mxu0 0.0
  %1138 = vmatpush1.xpose.msra.mxu0 %v494
  %1139 = vmatprep.subr.mxu0 0.0
  %1140 = vmatpush1.xpose.msra.mxu0 %v497
  %1141 = vmatprep.subr.mxu0 0.0
  %1142 = vmatpush1.xpose.msra.mxu0 %v500
  %1143 = vmatprep.subr.mxu0 0.0
  %1144 = vmatpush1.xpose.msra.mxu0 %v503
  %1145 = vmatprep.subr.mxu0 0.0
  %1146 = vmatpush1.xpose.msra.mxu0 %v506
  %1147 = vmatprep.subr.mxu0 0.0
  %1148 = vmatpush1.xpose.msra.mxu0 %v509
  %1149 = vmatprep.subr.mxu0 0.0
  %1150 = vmatpush1.xpose.msra.mxu0 %v512
  %1151 = vmatprep.subr.mxu0 0.0
  %1152 = vmatpush1.xpose.msra.mxu0 %v515
  %1153 = vmatprep.subr.mxu0 0.0
  %1154 = vmatpush1.xpose.msra.mxu0 %v518
  %1155 = vmatprep.subr.mxu0 0.0
  %1156 = vmatpush1.xpose.msra.mxu0 0.0
  %1157 = vmatprep.subr.mxu0 0.0
  %1158 = vmatpush1.xpose.msra.mxu0 0.0
  %1159 = vmatprep.subr.mxu0 0.0
  %1160 = vmatpush1.xpose.msra.mxu0 0.0
  %1161 = vmatprep.subr.mxu0 0.0
  %1162 = vmatpush1.xpose.msra.mxu0 0.0
  %1163 = vmatprep.subr.mxu0 0.0
  %1164 = vmatpush1.xpose.msra.mxu0 0.0
  %1165 = vmatprep.subr.mxu0 0.0
  %1166 = vmatpush1.xpose.msra.mxu0 0.0
  %1167 = vmatprep.subr.mxu0 0.0
  %1168 = vmatpush1.xpose.msra.mxu0 0.0
  %1169 = vmatprep.subr.mxu0 0.0
  %1170 = vmatpush1.xpose.msra.mxu0 0.0
  %1171 = vmatprep.subr.mxu0 0.0
  %1172 = vmatpush1.xpose.msra.mxu0 0.0
  %1173 = vmatprep.subr.mxu0 0.0
  %1174 = vmatpush1.xpose.msra.mxu0 0.0
  %1175 = vmatprep.subr.mxu0 0.0
  %1176 = vmatpush1.xpose.msra.mxu0 0.0
  %1177 = vmatprep.subr.mxu0 0.0
  %1178 = vmatpush1.xpose.msra.mxu0 0.0
  %1179 = vmatprep.subr.mxu0 0.0
  %1180 = vmatpush1.xpose.msra.mxu0 0.0
  %1181 = vmatprep.subr.mxu0 0.0
  %1182 = vmatpush1.xpose.msra.mxu0 0.0
  %1183 = vmatprep.subr.mxu0 0.0
  %1184 = vmatpush1.xpose.msra.mxu0 0.0
  %1185 = vmatprep.subr.mxu0 0.0
  %1186 = vmatpush1.xpose.msra.mxu0 0.0
  %1187 = vmatprep.mubr.f32.mxu0 0.0
  %1188 = vmatmul.mubr.f32.gmra.mrb[0].mxu0 %v1100
  %v1189 = vpop.f32.mrb[0].mxu0
  %v1190 = vadd.f32 0.0, %v1189
  %v1191 = vpop.f32.mrb[0].mxu0
  %1192 = vmatprep.mubr.f32.mxu0 0.0
  %1193 = vmatmul.mubr.f32.gmra.mrb[0].mxu0 %v1103
  %v1194 = vpop.f32.mrb[0].mxu0
  %v1195 = vadd.f32 0.0, %v1194
  %v1196 = vpop.f32.mrb[0].mxu0
  %1197 = vmatprep.mubr.f32.mxu0 0.0
  %1198 = vmatmul.mubr.f32.gmra.mrb[0].mxu0 %v1106
  %v1199 = vpop.f32.mrb[0].mxu0
  %v1200 = vadd.f32 0.0, %v1199
  %v1201 = vpop.f32.mrb[0].mxu0
  %1202 = vmatprep.mubr.f32.mxu0 0.0
  %1203 = vmatmul.mubr.f32.gmra.mrb[0].mxu0 %v1109
  %v1204 = vpop.f32.mrb[0].mxu0
  %v1205 = vadd.f32 0.0, %v1204
  %v1206 = vpop.f32.mrb[0].mxu0
  %1207 = vmatprep.mubr.f32.mxu0 0.0
  %1208 = vmatmul.mubr.f32.gmra.mrb[0].mxu0 %v1112
  %v1209 = vpop.f32.mrb[0].mxu0
  %v1210 = vadd.f32 0.0, %v1209
  %v1211 = vpop.f32.mrb[0].mxu0
  %1212 = vmatprep.mubr.f32.mxu0 0.0
  %1213 = vmatmul.mubr.f32.gmra.mrb[0].mxu0 %v1115
  %v1214 = vpop.f32.mrb[0].mxu0
  %v1215 = vadd.f32 0.0, %v1214
  %v1216 = vpop.f32.mrb[0].mxu0
  %1217 = vmatprep.mubr.f32.mxu0 0.0
  %1218 = vmatmul.mubr.f32.gmra.mrb[0].mxu0 %v1118
  %v1219 = vpop.f32.mrb[0].mxu0
  %v1220 = vadd.f32 0.0, %v1219
  %v1221 = vpop.f32.mrb[0].mxu0
  %1222 = vmatprep.mubr.f32.mxu0 0.0
  %1223 = vmatmul.mubr.f32.gmra.mrb[0].mxu0 %v1121
  %v1224 = vpop.f32.mrb[0].mxu0
  %v1225 = vadd.f32 0.0, %v1224
  %v1226 = vpop.f32.mrb[0].mxu0
  %1227 = vdwg.mxu0
  %1229 = vset.pattern.permute.xlu0 0
  %1230 = vperm.xlu0 %1229, %v954
  %v1231 = vpop.permute.xlu0 %1230
  %1234 = vset.pattern.permute.xlu0 0
  %1235 = vperm.xlu0 %1234, %v955
  %v1236 = vpop.permute.xlu0 %1235
  %1239 = vset.pattern.permute.xlu0 0
  %1240 = vperm.xlu0 %1239, %v956
  %v1241 = vpop.permute.xlu0 %1240
  %1244 = vset.pattern.permute.xlu0 0
  %1245 = vperm.xlu0 %1244, %v957
  %v1246 = vpop.permute.xlu0 %1245
  %1249 = vset.pattern.permute.xlu0 0
  %1250 = vperm.xlu0 %1249, %v958
  %v1251 = vpop.permute.xlu0 %1250
  %1254 = vset.pattern.permute.xlu0 0
  %1255 = vperm.xlu0 %1254, %v959
  %v1256 = vpop.permute.xlu0 %1255
  %1259 = vset.pattern.permute.xlu0 0
  %1260 = vperm.xlu0 %1259, %v960
  %v1261 = vpop.permute.xlu0 %1260
  %1264 = vset.pattern.permute.xlu0 0
  %1265 = vperm.xlu0 %1264, %v961
  %v1266 = vpop.permute.xlu0 %1265
  %v1268 = vadd.f32 %v1231, %v669
  %v1269 = vadd.f32 %v1236, %v669
  %v1270 = vadd.f32 %v1241, %v669
  %v1271 = vadd.f32 %v1246, %v669
  %v1272 = vadd.f32 %v1251, %v669
  %v1273 = vadd.f32 %v1256, %v669
  %v1274 = vadd.f32 %v1261, %v669
  %v1275 = vadd.f32 %v1266, %v669
  %v1276 = vmul.f32 %v1061, 2.0
  %v1277 = vmul.f32 %v1066, 2.0
  %v1278 = vmul.f32 %v1071, 2.0
  %v1279 = vmul.f32 %v1076, 2.0
  %v1280 = vmul.f32 %v1081, 2.0
  %v1281 = vmul.f32 %v1086, 2.0
  %v1282 = vmul.f32 %v1091, 2.0
  %v1283 = vmul.f32 %v1096, 2.0
  %v1284 = vsub.f32 %v1268, %v1276
  %v1285 = vsub.f32 %v1269, %v1277
  %v1286 = vsub.f32 %v1270, %v1278
  %v1287 = vsub.f32 %v1271, %v1279
  %v1288 = vsub.f32 %v1272, %v1280
  %v1289 = vsub.f32 %v1273, %v1281
  %v1290 = vsub.f32 %v1274, %v1282
  %v1291 = vsub.f32 %v1275, %v1283
  %v1292 = vmax.f32 %v1284, 1e-12
  %v1293 = vmax.f32 %v1285, 1e-12
  %v1294 = vmax.f32 %v1286, 1e-12
  %v1295 = vmax.f32 %v1287, 1e-12
  %v1296 = vmax.f32 %v1288, 1e-12
  %v1297 = vmax.f32 %v1289, 1e-12
  %v1298 = vmax.f32 %v1290, 1e-12
  %v1299 = vmax.f32 %v1291, 1e-12
  %1301 = vset.pattern.permute.xlu0 0
  %1302 = vperm.xlu0 %1301, %v962
  %v1303 = vpop.permute.xlu0 %1302
  %1306 = vset.pattern.permute.xlu0 0
  %1307 = vperm.xlu0 %1306, %v963
  %v1308 = vpop.permute.xlu0 %1307
  %1311 = vset.pattern.permute.xlu0 0
  %1312 = vperm.xlu0 %1311, %v964
  %v1313 = vpop.permute.xlu0 %1312
  %1316 = vset.pattern.permute.xlu0 0
  %1317 = vperm.xlu0 %1316, %v965
  %v1318 = vpop.permute.xlu0 %1317
  %1321 = vset.pattern.permute.xlu0 0
  %1322 = vperm.xlu0 %1321, %v966
  %v1323 = vpop.permute.xlu0 %1322
  %1326 = vset.pattern.permute.xlu0 0
  %1327 = vperm.xlu0 %1326, %v967
  %v1328 = vpop.permute.xlu0 %1327
  %1331 = vset.pattern.permute.xlu0 0
  %1332 = vperm.xlu0 %1331, %v968
  %v1333 = vpop.permute.xlu0 %1332
  %1336 = vset.pattern.permute.xlu0 0
  %1337 = vperm.xlu0 %1336, %v969
  %v1338 = vpop.permute.xlu0 %1337
  %v1340 = vadd.f32 %v1303, %v747
  %v1341 = vadd.f32 %v1308, %v747
  %v1342 = vadd.f32 %v1313, %v747
  %v1343 = vadd.f32 %v1318, %v747
  %v1344 = vadd.f32 %v1323, %v747
  %v1345 = vadd.f32 %v1328, %v747
  %v1346 = vadd.f32 %v1333, %v747
  %v1347 = vadd.f32 %v1338, %v747
  %v1348 = vmul.f32 %v1190, 2.0
  %v1349 = vmul.f32 %v1195, 2.0
  %v1350 = vmul.f32 %v1200, 2.0
  %v1351 = vmul.f32 %v1205, 2.0
  %v1352 = vmul.f32 %v1210, 2.0
  %v1353 = vmul.f32 %v1215, 2.0
  %v1354 = vmul.f32 %v1220, 2.0
  %v1355 = vmul.f32 %v1225, 2.0
  %v1356 = vsub.f32 %v1340, %v1348
  %v1357 = vsub.f32 %v1341, %v1349
  %v1358 = vsub.f32 %v1342, %v1350
  %v1359 = vsub.f32 %v1343, %v1351
  %v1360 = vsub.f32 %v1344, %v1352
  %v1361 = vsub.f32 %v1345, %v1353
  %v1362 = vsub.f32 %v1346, %v1354
  %v1363 = vsub.f32 %v1347, %v1355
  %v1364 = vmax.f32 %v1356, 1e-12
  %v1365 = vmax.f32 %v1357, 1e-12
  %v1366 = vmax.f32 %v1358, 1e-12
  %v1367 = vmax.f32 %v1359, 1e-12
  %v1368 = vmax.f32 %v1360, 1e-12
  %v1369 = vmax.f32 %v1361, 1e-12
  %v1370 = vmax.f32 %v1362, 1e-12
  %v1371 = vmax.f32 %v1363, 1e-12
  %v1372 = vadd.f32 %v1292, %v1364
  %v1373 = vadd.f32 %v1293, %v1365
  %v1374 = vadd.f32 %v1294, %v1366
  %v1375 = vadd.f32 %v1295, %v1367
  %v1376 = vadd.f32 %v1296, %v1368
  %v1377 = vadd.f32 %v1297, %v1369
  %v1378 = vadd.f32 %v1298, %v1370
  %v1379 = vadd.f32 %v1299, %v1371
  %v1380 = vmul.f32 %v1292, %v1364
  %v1381 = vmul.f32 %v1293, %v1365
  %v1382 = vmul.f32 %v1294, %v1366
  %v1383 = vmul.f32 %v1295, %v1367
  %v1384 = vmul.f32 %v1296, %v1368
  %v1385 = vmul.f32 %v1297, %v1369
  %v1386 = vmul.f32 %v1298, %v1370
  %v1387 = vmul.f32 %v1299, %v1371
  %v1388 = vrsqrt.pop %v1380
  %v1389 = vmul.f32 %v1380, %v1388
  %vm1390 = vcmp.eq.f32.partialorder %v1380, inf
  %v1391 = vsel %vm1390, %v1380, %v1389
  %vm1392 = vcmp.eq.f32.partialorder %v1380, 0.0
  %v1393 = vand.u32 %v1380, 2147483648
  %v1394 = vsel %vm1392, %v1393, %v1391
  %v1395 = vrsqrt.pop %v1381
  %v1396 = vmul.f32 %v1381, %v1395
  %vm1397 = vcmp.eq.f32.partialorder %v1381, inf
  %v1398 = vsel %vm1397, %v1381, %v1396
  %vm1399 = vcmp.eq.f32.partialorder %v1381, 0.0
  %v1400 = vand.u32 %v1381, 2147483648
  %v1401 = vsel %vm1399, %v1400, %v1398
  %v1402 = vrsqrt.pop %v1382
  %v1403 = vmul.f32 %v1382, %v1402
  %vm1404 = vcmp.eq.f32.partialorder %v1382, inf
  %v1405 = vsel %vm1404, %v1382, %v1403
  %vm1406 = vcmp.eq.f32.partialorder %v1382, 0.0
  %v1407 = vand.u32 %v1382, 2147483648
  %v1408 = vsel %vm1406, %v1407, %v1405
  %v1409 = vrsqrt.pop %v1383
  %v1410 = vmul.f32 %v1383, %v1409
  %vm1411 = vcmp.eq.f32.partialorder %v1383, inf
  %v1412 = vsel %vm1411, %v1383, %v1410
  %vm1413 = vcmp.eq.f32.partialorder %v1383, 0.0
  %v1414 = vand.u32 %v1383, 2147483648
  %v1415 = vsel %vm1413, %v1414, %v1412
  %v1416 = vrsqrt.pop %v1384
  %v1417 = vmul.f32 %v1384, %v1416
  %vm1418 = vcmp.eq.f32.partialorder %v1384, inf
  %v1419 = vsel %vm1418, %v1384, %v1417
  %vm1420 = vcmp.eq.f32.partialorder %v1384, 0.0
  %v1421 = vand.u32 %v1384, 2147483648
  %v1422 = vsel %vm1420, %v1421, %v1419
  %v1423 = vrsqrt.pop %v1385
  %v1424 = vmul.f32 %v1385, %v1423
  %vm1425 = vcmp.eq.f32.partialorder %v1385, inf
  %v1426 = vsel %vm1425, %v1385, %v1424
  %vm1427 = vcmp.eq.f32.partialorder %v1385, 0.0
  %v1428 = vand.u32 %v1385, 2147483648
  %v1429 = vsel %vm1427, %v1428, %v1426
  %v1430 = vrsqrt.pop %v1386
  %v1431 = vmul.f32 %v1386, %v1430
  %vm1432 = vcmp.eq.f32.partialorder %v1386, inf
  %v1433 = vsel %vm1432, %v1386, %v1431
  %vm1434 = vcmp.eq.f32.partialorder %v1386, 0.0
  %v1435 = vand.u32 %v1386, 2147483648
  %v1436 = vsel %vm1434, %v1435, %v1433
  %v1437 = vrsqrt.pop %v1387
  %v1438 = vmul.f32 %v1387, %v1437
  %vm1439 = vcmp.eq.f32.partialorder %v1387, inf
  %v1440 = vsel %vm1439, %v1387, %v1438
  %vm1441 = vcmp.eq.f32.partialorder %v1387, 0.0
  %v1442 = vand.u32 %v1387, 2147483648
  %v1443 = vsel %vm1441, %v1442, %v1440
  %v1444 = vmul.f32 %v1394, 2.0
  %v1445 = vmul.f32 %v1401, 2.0
  %v1446 = vmul.f32 %v1408, 2.0
  %v1447 = vmul.f32 %v1415, 2.0
  %v1448 = vmul.f32 %v1422, 2.0
  %v1449 = vmul.f32 %v1429, 2.0
  %v1450 = vmul.f32 %v1436, 2.0
  %v1451 = vmul.f32 %v1443, 2.0
  %v1452 = vsub.f32 %v1372, %v1444
  %v1453 = vsub.f32 %v1373, %v1445
  %v1454 = vsub.f32 %v1374, %v1446
  %v1455 = vsub.f32 %v1375, %v1447
  %v1456 = vsub.f32 %v1376, %v1448
  %v1457 = vsub.f32 %v1377, %v1449
  %v1458 = vsub.f32 %v1378, %v1450
  %v1459 = vsub.f32 %v1379, %v1451
  %s1460 = sadd.s32 %s869, 64
  %v1461 = vstv %s1460
  %v1462 = vadd.s32 %v1461, %v871
  %v1463 = vadd.s32 %v1461, %v872
  %v1464 = vadd.s32 %v1461, %v873
  %v1465 = vadd.s32 %v1461, %v874
  %v1466 = vadd.s32 %v1461, %v875
  %v1467 = vadd.s32 %v1461, %v876
  %v1468 = vadd.s32 %v1461, %v877
  %v1469 = vadd.s32 %v1461, %v878
  %vm1470 = vcmp.lt.s32.totalorder %v1462, 8
  %vm1471 = vcmp.lt.s32.totalorder %v1463, 8
  %vm1472 = vcmp.lt.s32.totalorder %v1464, 8
  %vm1473 = vcmp.lt.s32.totalorder %v1465, 8
  %vm1474 = vcmp.lt.s32.totalorder %v1466, 8
  %vm1475 = vcmp.lt.s32.totalorder %v1467, 8
  %vm1476 = vcmp.lt.s32.totalorder %v1468, 8
  %vm1477 = vcmp.lt.s32.totalorder %v1469, 8
  %v1478 = vsel %vm1470, 1, 0
  %v1479 = vsel %vm1471, 1, 0
  %v1480 = vsel %vm1472, 1, 0
  %v1481 = vsel %vm1473, 1, 0
  %v1482 = vsel %vm1474, 1, 0
  %v1483 = vsel %vm1475, 1, 0
  %v1484 = vsel %vm1476, 1, 0
  %v1485 = vsel %vm1477, 1, 0
  %vm1486 = vcmp.eq.s32.totalorder %v1478, 1
  %vm1487 = vcmp.eq.s32.totalorder %v1479, 1
  %vm1488 = vcmp.eq.s32.totalorder %v1480, 1
  %vm1489 = vcmp.eq.s32.totalorder %v1481, 1
  %vm1490 = vcmp.eq.s32.totalorder %v1482, 1
  %vm1491 = vcmp.eq.s32.totalorder %v1483, 1
  %vm1492 = vcmp.eq.s32.totalorder %v1484, 1
  %vm1493 = vcmp.eq.s32.totalorder %v1485, 1
  %vm1494 = vmand %vm1486, %vm913
  %vm1495 = vmand %vm1487, %vm913
  %vm1496 = vmand %vm1488, %vm913
  %vm1497 = vmand %vm1489, %vm913
  %vm1498 = vmand %vm1490, %vm913
  %vm1499 = vmand %vm1491, %vm913
  %vm1500 = vmand %vm1492, %vm913
  %vm1501 = vmand %vm1493, %vm913
  %v1502 = vsel %vm1494, %v1452, 0.0
  %v1503 = vsel %vm1495, %v1453, 0.0
  %v1504 = vsel %vm1496, %v1454, 0.0
  %v1505 = vsel %vm1497, %v1455, 0.0
  %v1506 = vsel %vm1498, %v1456, 0.0
  %v1507 = vsel %vm1499, %v1457, 0.0
  %v1508 = vsel %vm1500, %v1458, 0.0
  %v1509 = vsel %vm1501, %v1459, 0.0
  %v1510 = vadd.f32 %v1502, %v1503
  %v1511 = vadd.f32 %v1510, %v1504
  %v1512 = vadd.f32 %v1511, %v1505
  %v1513 = vadd.f32 %v1512, %v1506
  %v1514 = vadd.f32 %v1513, %v1507
  %v1515 = vadd.f32 %v1514, %v1508
  %v1516 = vadd.f32 %v1515, %v1509
  %v1517 = vadd.f32 %v937, %v1516
  %v1518 = vstv %s196
  %v1519 = vmul.f32 %v1518, %v1517
  %1520 = vst [vmem:[%s10] sm:$0xff] %v1519
  // Predicated region
  $region34: #{rel_loss.1} parent=0 // pred_check
    _
  $region35: #{rel_loss.1} parent=0 // pred_check_branch
    %1522 = sbr.rel (0) target = $region37
  $region36: #{rel_loss.1} parent=0 // pred_region
    _
  $region37: #{rel_loss.1} parent=0 // pred_fallthru
    _
  // Predicated region
  $region38: #{rel_loss.1} parent=0 // pred_check
    _
  $region39: #{rel_loss.1} parent=0 // pred_check_branch
    %1524 = sbr.rel (0) target = $region41
  $region40: #{rel_loss.1} parent=0 // pred_region
    _
  $region41: #{rel_loss.1} parent=0 // pred_fallthru
    _

</llo_original>
